<compile_context>
chip_gen: v7x
topology: tpu7x:2x2x1
jax: 0.10.0
libtpu: 0.0.40
codegen_flags: <defaults>
</compile_context>

<pallas_src>
import jax
import jax.numpy as jnp
from jax.experimental import pallas as pl
from jax.experimental.pallas import tpu as pltpu


def _round_up(x, m):
    return ((x + m - 1) // m) * m


def _pad(x, shape):
    return jnp.pad(x, [(0, t - s) for s, t in zip(x.shape, shape)])


# -----------------------------------------------------------------------------
# Pallas kernel: G graphs per grid step, everything VMEM-resident
# -----------------------------------------------------------------------------
def wln_kernel(
    # per-step inputs (VMEM blocks)
    h0_ref,       # (G, N, Hp) bf16  gathered atom embeddings
    a_hat_ref,    # (G, N, N)  bf16  normalized adjacency D^-1/2 A D^-1/2
    cand_u_ref,   # (G, 1, Cp) int32 candidate u indices
    cand_v_ref,   # (G, 1, Cp) int32 candidate v indices
    # weights (whole-array VMEM residents)
    wa_ref,       # (Hp, Hp)   bf16  atom_encoder.linear weight (pre-transposed)
    ba_ref,       # (1, Hp)    f32   atom_encoder.linear bias
    wc_ref,       # (L, Hp, Hp) bf16 stacked GraphConv weights
    bc_ref,       # (L, 1, Hp)  f32  stacked GraphConv biases
    w1u_ref,      # (Hp, Hp)   bf16  scorer layer-1 weight, u half (pre-transposed)
    w1v_ref,      # (Hp, Hp)   bf16  scorer layer-1 weight, v half (pre-transposed)
    b1_ref,       # (1, Hp)    f32   scorer layer-1 bias
    w2t_ref,      # (1, Hp)    f32   scorer layer-2 weight (row vector, VPU path)
    b2_ref,       # (1, 1)     f32   scorer layer-2 bias
    # output
    scores_ref,   # (G, Cp)    f32   lane-dense score rows for this step
):
    f32, bf16 = jnp.float32, jnp.bfloat16
    G, N, Hp = h0_ref.shape
    Cp = scores_ref.shape[-1]
    GN = G * N

    # --- AtomEncoder linear over all G*N nodes at once -----------------------
    h = jnp.dot(h0_ref[...].reshape(GN, Hp), wa_ref[...],
                preferred_element_type=f32) + ba_ref[...]

    # --- num_message_passing GraphConv layers + ReLU --------------------------
    num_layers = wc_ref.shape[0]
    for i in range(num_layers):                      # static unroll (L = 3)
        hw = jnp.dot(h.astype(bf16), wc_ref[i], preferred_element_type=f32)
        # Re-read a_hat each layer: no hoisted (G,N,N) live range across the unroll.
        h = jax.lax.dot_general(
            a_hat_ref[...], hw.astype(bf16).reshape(G, N, Hp),
            dimension_numbers=(((2,), (1,)), ((0,), (0,))),
            preferred_element_type=f32)              # (G, N, Hp)
        h = h.reshape(GN, Hp) + bc_ref[i]
        h = jnp.maximum(h, 0.0)

    # --- Scorer layer-1, hoisted before the candidate gather ------------------
    # concat-free split: s[c] = relu(P[u_c] + Q[v_c] + b1),  P = h@W1u, Q = h@W1v
    hb = h.astype(bf16)
    P = jnp.dot(hb, w1u_ref[...], preferred_element_type=f32).astype(bf16).reshape(G, N, Hp)
    Q = jnp.dot(hb, w1v_ref[...], preferred_element_type=f32).astype(bf16).reshape(G, N, Hp)

    # --- One-hot gather on the MXU: sel[g, n, c] = (n == cand[g, c]) ----------
    node_iota = jax.lax.broadcasted_iota(jnp.int32, (G, N, Cp), 1)
    sel_u = jnp.where(node_iota == cand_u_ref[...], 1.0, 0.0).astype(bf16)  # (G,N,Cp)
    sel_v = jnp.where(node_iota == cand_v_ref[...], 1.0, 0.0).astype(bf16)
    dn = (((1,), (1,)), ((0,), (0,)))                # contract over N, batch over G
    s = (jax.lax.dot_general(sel_u, P, dn, preferred_element_type=f32)
         + jax.lax.dot_general(sel_v, Q, dn, preferred_element_type=f32)
         + b1_ref[...])                              # (G, Cp, Hp)
    s = jnp.maximum(s, 0.0)

    # --- Scorer layer-2 as VPU multiply + lane reduction (no M=1 matmul) ------
    scores_ref[...] = jnp.sum(s * w2t_ref[...], axis=-1) + b2_ref[...]


# -----------------------------------------------------------------------------
# Wrapper: embedding gather / adjacency normalization / padding in plain JAX
# -----------------------------------------------------------------------------
def wln_forward(params, adj, atom_types, bond_types, candidates, *, graphs_per_step=2):
    """Batched WLN forward.

    adj:        (B, N, N) 0/1 adjacency (no self-loops)
    atom_types: (B, N)    int32 in [0, 100)
    bond_types: (B, E)    int32  -- unused: BondEncoder output is dead in the
                                    reference forward, so it is skipped.
    candidates: (B, C, 2) int32 node-index pairs
    returns:    (B, C)    f32 scores
    """
    del bond_types  # dead path in the reference module's forward
    f32, bf16 = jnp.float32, jnp.bfloat16
    B, N, _ = adj.shape
    C = candidates.shape[1]
    H = params["e_atom"].shape[1]
    L = params["wc"].shape[0]

    # ---- TPU-friendly padded sizes -------------------------------------------
    Hp = max(128, _round_up(H, 128))     # lane-dense hidden dim
    Cp = max(128, _round_up(C, 128))     # lane-dense score row
    Np = max(16, _round_up(N, 16))       # bf16 sublane packing

    G = graphs_per_step
    steps = -(-B // G)
    if steps > 1 and steps % 2 == 1:
        steps += 1                        # even grid -> both v7x TensorCores busy
    Bp = steps * G

    # ---- weights padded with zeros (padded H lanes stay exactly zero) --------
    e_atom = _pad(params["e_atom"].astype(f32), (100, Hp))
    wa  = _pad(params["wa"],  (Hp, Hp)).astype(bf16)
    ba  = _pad(params["ba"],  (1, Hp)).astype(f32)
    wc  = _pad(params["wc"],  (L, Hp, Hp)).astype(bf16)
    bc  = _pad(params["bc"],  (L, 1, Hp)).astype(f32)
    w1u = _pad(params["w1u"], (Hp, Hp)).astype(bf16)
    w1v = _pad(params["w1v"], (Hp, Hp)).astype(bf16)
    b1  = _pad(params["b1"],  (1, Hp)).astype(f32)
    w2t = _pad(params["w2t"], (1, Hp)).astype(f32)   # stays f32: VPU multiply path
    b2  = params["b2"].astype(f32)

    # ---- per-graph inputs, padded along batch / node axes --------------------
    atom_types_p = jnp.zeros((Bp, Np), jnp.int32).at[:B, :N].set(atom_types.astype(jnp.int32))
    adj_p = jnp.zeros((Bp, Np, Np), f32).at[:B, :N, :N].set(adj.astype(f32))

    # Atom embedding lookup as a cheap XLA gather (no one-hot (N,100) matmul).
    h0 = jnp.take(e_atom, atom_types_p, axis=0).astype(bf16)            # (Bp,Np,Hp)

    # DGL GraphConv 'both' normalization: A_hat = D^-1/2 A D^-1/2 (padded rows = 0).
    deg = jnp.sum(adj_p, axis=-1)
    inv_sqrt = jnp.where(deg > 0, jax.lax.rsqrt(jnp.maximum(deg, 1e-12)), 0.0)
    a_hat = (inv_sqrt[..., :, None] * adj_p * inv_sqrt[..., None, :]).astype(bf16)

    cand = candidates.astype(jnp.int32)
    cand_u = jnp.zeros((Bp, 1, Cp), jnp.int32).at[:B, 0, :C].set(cand[..., 0])
    cand_v = jnp.zeros((Bp, 1, Cp), jnp.int32).at[:B, 0, :C].set(cand[..., 1])

    # Whole-array VMEM residents (single copy, block index never changes).
    vmem = pl.BlockSpec(memory_space=pltpu.MemorySpace.VMEM)

    scores = pl.pallas_call(
        wln_kernel,
        out_shape=jax.ShapeDtypeStruct((steps, G, Cp), f32),
        grid=(steps,),
        in_specs=[
            pl.BlockSpec((G, Np, Hp), lambda s: (s, 0, 0)),   # h0
            pl.BlockSpec((G, Np, Np), lambda s: (s, 0, 0)),   # a_hat
            pl.BlockSpec((G, 1, Cp),  lambda s: (s, 0, 0)),   # cand_u
            pl.BlockSpec((G, 1, Cp),  lambda s: (s, 0, 0)),   # cand_v
            vmem, vmem,            # wa, ba
            vmem, vmem,            # wc, bc
            vmem, vmem, vmem,      # w1u, w1v, b1
            vmem, vmem,            # w2t, b2
        ],
        out_specs=pl.BlockSpec((None, G, Cp), lambda s: (s, 0, 0)),
        compiler_params=pltpu.CompilerParams(
            # Independent graph blocks: shard the grid across v7x's 2 TensorCores.
            dimension_semantics=("parallel",),
            # Footprint here is < 1 MiB; 16 MiB fits every generation's scoped
            # default (v5e). Re-budget (and tile a_hat over N) before N grows
            # toward v7x's 64 MiB VMEM.
            vmem_limit_bytes=16 * 1024 * 1024,
        ),
    )(h0, a_hat, cand_u, cand_v, wa, ba, wc, bc, w1u, w1v, b1, w2t, b2)

    # torch.stack(scores).squeeze() per graph -> (B, C)
    return scores.reshape(Bp, Cp)[:B, :C]


def init_params(key, hidden_dim, num_message_passing=3):
    H = hidden_dim
    ks = jax.random.split(key, 10)
    norm = lambda k, s: (0.1 * jax.random.normal(k, s)).astype(jnp.float32)
    return {
        # AtomEncoder
        "e_atom": norm(ks[0], (100, H)),
        "wa": norm(ks[1], (H, H)),           # pre-transposed: x @ wa
        "ba": norm(ks[2], (1, H)),
        # GraphConv stack
        "wc": norm(ks[3], (num_message_passing, H, H)),
        "bc": norm(ks[4], (num_message_passing, 1, H)),
        # Scorer MLP: Linear(2H,H) row-split into u/v halves -> ReLU -> Linear(H,1)
        "w1u": norm(ks[5], (H, H)),
        "w1v": norm(ks[6], (H, H)),
        "b1": norm(ks[7], (1, H)),
        "w2t": norm(ks[8], (1, H)),          # row-vector form of Linear(H,1) weight
        "b2": norm(ks[9], (1, 1)),
    }


if __name__ == "__main__":
    key = jax.random.PRNGKey(0)
    k_par, k_adj, k_atom, k_bond, k_cand = jax.random.split(key, 5)

    hidden_dim = 32
    B = 4    # graphs (grid = B / graphs_per_step = 2 steps, even)
    N = 16   # atoms per graph
    E = 16   # bonds per graph (BondEncoder path is dead -> unused)
    C = 8    # candidate (u, v) pairs per graph

    params = init_params(k_par, hidden_dim, num_message_passing=3)

    # Symmetric random adjacency, no self-loops, per graph
    upper = (jax.random.uniform(k_adj, (B, N, N)) < 0.3).astype(jnp.float32)
    upper = jnp.triu(upper, k=1)
    adj = upper + jnp.swapaxes(upper, -1, -2)

    atom_types = jax.random.randint(k_atom, (B, N), 0, 100, dtype=jnp.int32)
    bond_types = jax.random.randint(k_bond, (B, E), 0, 10, dtype=jnp.int32)
    candidates = jax.random.randint(k_cand, (B, C, 2), 0, N, dtype=jnp.int32)

    scores = wln_forward(params, adj, atom_types, bond_types, candidates,
                         graphs_per_step=2)
    scores = jax.block_until_ready(scores)
    assert scores.shape == (B, C), scores.shape
    print("KERNEL_OK")
</pallas_src>

<mosaic_0001>
module attributes {stable_mosaic.version = 11 : i64} {
  func.func @wln_kernel(%arg0: i32, %arg1: memref<2x16x128xbf16, #tpu.memory_space<vmem>>, %arg2: memref<2x16x16xbf16, #tpu.memory_space<vmem>>, %arg3: memref<2x1x128xi32, #tpu.memory_space<vmem>>, %arg4: memref<2x1x128xi32, #tpu.memory_space<vmem>>, %arg5: memref<128x128xbf16, #tpu.memory_space<vmem>>, %arg6: memref<1x128xf32, #tpu.memory_space<vmem>>, %arg7: memref<3x128x128xbf16, #tpu.memory_space<vmem>>, %arg8: memref<3x1x128xf32, #tpu.memory_space<vmem>>, %arg9: memref<128x128xbf16, #tpu.memory_space<vmem>>, %arg10: memref<128x128xbf16, #tpu.memory_space<vmem>>, %arg11: memref<1x128xf32, #tpu.memory_space<vmem>>, %arg12: memref<1x128xf32, #tpu.memory_space<vmem>>, %arg13: memref<1x1xf32, #tpu.memory_space<vmem>>, %arg14: memref<1x2x128xf32, #tpu.memory_space<vmem>>) attributes {dimension_semantics = [#tpu.dimension_semantics<parallel>], iteration_bounds = array<i64: 2>, scalar_prefetch = 0 : i64, scratch_operands = 0 : i64, tpu.core_type = #tpu.core_type<tc>, window_params = [{transform_indices = @transform_0, window_bounds = array<i64: 2, 16, 128>}, {transform_indices = @transform_1, window_bounds = array<i64: 2, 16, 16>}, {transform_indices = @transform_2, window_bounds = array<i64: 2, 1, 128>}, {transform_indices = @transform_3, window_bounds = array<i64: 2, 1, 128>}, {pipeline_mode = #tpu.pipeline_mode<synchronous>, transform_indices = @transform_4, window_bounds = array<i64: 128, 128>}, {pipeline_mode = #tpu.pipeline_mode<synchronous>, transform_indices = @transform_5, window_bounds = array<i64: 1, 128>}, {pipeline_mode = #tpu.pipeline_mode<synchronous>, transform_indices = @transform_6, window_bounds = array<i64: 3, 128, 128>}, {pipeline_mode = #tpu.pipeline_mode<synchronous>, transform_indices = @transform_7, window_bounds = array<i64: 3, 1, 128>}, {pipeline_mode = #tpu.pipeline_mode<synchronous>, transform_indices = @transform_8, window_bounds = array<i64: 128, 128>}, {pipeline_mode = #tpu.pipeline_mode<synchronous>, transform_indices = @transform_9, window_bounds = array<i64: 128, 128>}, {pipeline_mode = #tpu.pipeline_mode<synchronous>, transform_indices = @transform_10, window_bounds = array<i64: 1, 128>}, {pipeline_mode = #tpu.pipeline_mode<synchronous>, transform_indices = @transform_11, window_bounds = array<i64: 1, 128>}, {pipeline_mode = #tpu.pipeline_mode<synchronous>, transform_indices = @transform_12, window_bounds = array<i64: 1, 1>}, {transform_indices = @transform_13, window_bounds = array<i64: 1, 2, 128>}]} {
    %c0 = arith.constant 0 : index
    %c0_0 = arith.constant 0 : index
    %c0_1 = arith.constant 0 : index
    %0 = vector.load %arg1[%c0, %c0_0, %c0_1] : memref<2x16x128xbf16, #tpu.memory_space<vmem>>, vector<2x16x128xbf16>
    %1 = vector.shape_cast %0 : vector<2x16x128xbf16> to vector<32x128xbf16>
    %c0_2 = arith.constant 0 : index
    %c0_3 = arith.constant 0 : index
    %2 = vector.load %arg5[%c0_2, %c0_3] : memref<128x128xbf16, #tpu.memory_space<vmem>>, vector<128x128xbf16>
    %cst = arith.constant dense<0.000000e+00> : vector<32x128xf32>
    %3 = tpu.matmul %1, %2, %cst {dimension_numbers = #tpu.dot_dimension_numbers<[1], [0], [0], [1], [0, 0, 1, 1], [], []>} : vector<32x128xbf16>, vector<128x128xbf16>, vector<32x128xf32> -> vector<32x128xf32>
    %c0_4 = arith.constant 0 : index
    %c0_5 = arith.constant 0 : index
    %4 = vector.load %arg6[%c0_4, %c0_5] : memref<1x128xf32, #tpu.memory_space<vmem>>, vector<1x128xf32>
    %5 = vector.broadcast %4 : vector<1x128xf32> to vector<32x128xf32>
    %6 = arith.addf %3, %5 : vector<32x128xf32>
    %7 = arith.truncf %6 : vector<32x128xf32> to vector<32x128xbf16>
    %c0_6 = arith.constant 0 : index
    %c0_7 = arith.constant 0 : index
    %c0_8 = arith.constant 0 : index
    %8 = vector.load %arg7[%c0_6, %c0_7, %c0_8] : memref<3x128x128xbf16, #tpu.memory_space<vmem>>, vector<1x128x128xbf16>
    %9 = vector.shape_cast %8 : vector<1x128x128xbf16> to vector<128x128xbf16>
    %cst_9 = arith.constant dense<0.000000e+00> : vector<32x128xf32>
    %10 = tpu.matmul %7, %9, %cst_9 {dimension_numbers = #tpu.dot_dimension_numbers<[1], [0], [0], [1], [0, 0, 1, 1], [], []>} : vector<32x128xbf16>, vector<128x128xbf16>, vector<32x128xf32> -> vector<32x128xf32>
    %c0_10 = arith.constant 0 : index
    %c0_11 = arith.constant 0 : index
    %c0_12 = arith.constant 0 : index
    %11 = vector.load %arg2[%c0_10, %c0_11, %c0_12] : memref<2x16x16xbf16, #tpu.memory_space<vmem>>, vector<2x16x16xbf16>
    %12 = arith.truncf %10 : vector<32x128xf32> to vector<32x128xbf16>
    %13 = vector.shape_cast %12 : vector<32x128xbf16> to vector<2x16x128xbf16>
    %cst_13 = arith.constant dense<0.000000e+00> : vector<2x16x128xf32>
    %14 = tpu.matmul %11, %13, %cst_13 {dimension_numbers = #tpu.dot_dimension_numbers<[2], [1], [1], [2], [0, 0, 0, 1, 1, 2], [0], [0]>} : vector<2x16x16xbf16>, vector<2x16x128xbf16>, vector<2x16x128xf32> -> vector<2x16x128xf32>
    %15 = vector.shape_cast %14 : vector<2x16x128xf32> to vector<32x128xf32>
    %c0_14 = arith.constant 0 : index
    %c0_15 = arith.constant 0 : index
    %c0_16 = arith.constant 0 : index
    %16 = vector.load %arg8[%c0_14, %c0_15, %c0_16] : memref<3x1x128xf32, #tpu.memory_space<vmem>>, vector<1x1x128xf32>
    %17 = vector.shape_cast %16 : vector<1x1x128xf32> to vector<1x128xf32>
    %18 = vector.broadcast %17 : vector<1x128xf32> to vector<32x128xf32>
    %19 = arith.addf %15, %18 : vector<32x128xf32>
    %cst_17 = arith.constant 0.000000e+00 : f32
    %20 = vector.broadcast %cst_17 : f32 to vector<32x128xf32>
    %21 = arith.maximumf %19, %20 : vector<32x128xf32>
    %22 = arith.truncf %21 : vector<32x128xf32> to vector<32x128xbf16>
    %c1 = arith.constant 1 : index
    %c0_18 = arith.constant 0 : index
    %c0_19 = arith.constant 0 : index
    %23 = vector.load %arg7[%c1, %c0_18, %c0_19] : memref<3x128x128xbf16, #tpu.memory_space<vmem>>, vector<1x128x128xbf16>
    %24 = vector.shape_cast %23 : vector<1x128x128xbf16> to vector<128x128xbf16>
    %cst_20 = arith.constant dense<0.000000e+00> : vector<32x128xf32>
    %25 = tpu.matmul %22, %24, %cst_20 {dimension_numbers = #tpu.dot_dimension_numbers<[1], [0], [0], [1], [0, 0, 1, 1], [], []>} : vector<32x128xbf16>, vector<128x128xbf16>, vector<32x128xf32> -> vector<32x128xf32>
    %c0_21 = arith.constant 0 : index
    %c0_22 = arith.constant 0 : index
    %c0_23 = arith.constant 0 : index
    %26 = vector.load %arg2[%c0_21, %c0_22, %c0_23] : memref<2x16x16xbf16, #tpu.memory_space<vmem>>, vector<2x16x16xbf16>
    %27 = arith.truncf %25 : vector<32x128xf32> to vector<32x128xbf16>
    %28 = vector.shape_cast %27 : vector<32x128xbf16> to vector<2x16x128xbf16>
    %cst_24 = arith.constant dense<0.000000e+00> : vector<2x16x128xf32>
    %29 = tpu.matmul %26, %28, %cst_24 {dimension_numbers = #tpu.dot_dimension_numbers<[2], [1], [1], [2], [0, 0, 0, 1, 1, 2], [0], [0]>} : vector<2x16x16xbf16>, vector<2x16x128xbf16>, vector<2x16x128xf32> -> vector<2x16x128xf32>
    %30 = vector.shape_cast %29 : vector<2x16x128xf32> to vector<32x128xf32>
    %c1_25 = arith.constant 1 : index
    %c0_26 = arith.constant 0 : index
    %c0_27 = arith.constant 0 : index
    %31 = vector.load %arg8[%c1_25, %c0_26, %c0_27] : memref<3x1x128xf32, #tpu.memory_space<vmem>>, vector<1x1x128xf32>
    %32 = vector.shape_cast %31 : vector<1x1x128xf32> to vector<1x128xf32>
    %33 = vector.broadcast %32 : vector<1x128xf32> to vector<32x128xf32>
    %34 = arith.addf %30, %33 : vector<32x128xf32>
    %cst_28 = arith.constant 0.000000e+00 : f32
    %35 = vector.broadcast %cst_28 : f32 to vector<32x128xf32>
    %36 = arith.maximumf %34, %35 : vector<32x128xf32>
    %37 = arith.truncf %36 : vector<32x128xf32> to vector<32x128xbf16>
    %c2 = arith.constant 2 : index
    %c0_29 = arith.constant 0 : index
    %c0_30 = arith.constant 0 : index
    %38 = vector.load %arg7[%c2, %c0_29, %c0_30] : memref<3x128x128xbf16, #tpu.memory_space<vmem>>, vector<1x128x128xbf16>
    %39 = vector.shape_cast %38 : vector<1x128x128xbf16> to vector<128x128xbf16>
    %cst_31 = arith.constant dense<0.000000e+00> : vector<32x128xf32>
    %40 = tpu.matmul %37, %39, %cst_31 {dimension_numbers = #tpu.dot_dimension_numbers<[1], [0], [0], [1], [0, 0, 1, 1], [], []>} : vector<32x128xbf16>, vector<128x128xbf16>, vector<32x128xf32> -> vector<32x128xf32>
    %c0_32 = arith.constant 0 : index
    %c0_33 = arith.constant 0 : index
    %c0_34 = arith.constant 0 : index
    %41 = vector.load %arg2[%c0_32, %c0_33, %c0_34] : memref<2x16x16xbf16, #tpu.memory_space<vmem>>, vector<2x16x16xbf16>
    %42 = arith.truncf %40 : vector<32x128xf32> to vector<32x128xbf16>
    %43 = vector.shape_cast %42 : vector<32x128xbf16> to vector<2x16x128xbf16>
    %cst_35 = arith.constant dense<0.000000e+00> : vector<2x16x128xf32>
    %44 = tpu.matmul %41, %43, %cst_35 {dimension_numbers = #tpu.dot_dimension_numbers<[2], [1], [1], [2], [0, 0, 0, 1, 1, 2], [0], [0]>} : vector<2x16x16xbf16>, vector<2x16x128xbf16>, vector<2x16x128xf32> -> vector<2x16x128xf32>
    %45 = vector.shape_cast %44 : vector<2x16x128xf32> to vector<32x128xf32>
    %c2_36 = arith.constant 2 : index
    %c0_37 = arith.constant 0 : index
    %c0_38 = arith.constant 0 : index
    %46 = vector.load %arg8[%c2_36, %c0_37, %c0_38] : memref<3x1x128xf32, #tpu.memory_space<vmem>>, vector<1x1x128xf32>
    %47 = vector.shape_cast %46 : vector<1x1x128xf32> to vector<1x128xf32>
    %48 = vector.broadcast %47 : vector<1x128xf32> to vector<32x128xf32>
    %49 = arith.addf %45, %48 : vector<32x128xf32>
    %cst_39 = arith.constant 0.000000e+00 : f32
    %50 = vector.broadcast %cst_39 : f32 to vector<32x128xf32>
    %51 = arith.maximumf %49, %50 : vector<32x128xf32>
    %52 = arith.truncf %51 : vector<32x128xf32> to vector<32x128xbf16>
    %c0_40 = arith.constant 0 : index
    %c0_41 = arith.constant 0 : index
    %53 = vector.load %arg9[%c0_40, %c0_41] : memref<128x128xbf16, #tpu.memory_space<vmem>>, vector<128x128xbf16>
    %cst_42 = arith.constant dense<0.000000e+00> : vector<32x128xf32>
    %54 = tpu.matmul %52, %53, %cst_42 {dimension_numbers = #tpu.dot_dimension_numbers<[1], [0], [0], [1], [0, 0, 1, 1], [], []>} : vector<32x128xbf16>, vector<128x128xbf16>, vector<32x128xf32> -> vector<32x128xf32>
    %55 = arith.truncf %54 : vector<32x128xf32> to vector<32x128xbf16>
    %56 = vector.shape_cast %55 : vector<32x128xbf16> to vector<2x16x128xbf16>
    %c0_43 = arith.constant 0 : index
    %c0_44 = arith.constant 0 : index
    %57 = vector.load %arg10[%c0_43, %c0_44] : memref<128x128xbf16, #tpu.memory_space<vmem>>, vector<128x128xbf16>
    %cst_45 = arith.constant dense<0.000000e+00> : vector<32x128xf32>
    %58 = tpu.matmul %52, %57, %cst_45 {dimension_numbers = #tpu.dot_dimension_numbers<[1], [0], [0], [1], [0, 0, 1, 1], [], []>} : vector<32x128xbf16>, vector<128x128xbf16>, vector<32x128xf32> -> vector<32x128xf32>
    %59 = arith.truncf %58 : vector<32x128xf32> to vector<32x128xbf16>
    %60 = vector.shape_cast %59 : vector<32x128xbf16> to vector<2x16x128xbf16>
    %61 = tpu.iota {dimensions = array<i32: 1>} : vector<2x16x128xi32>
    %c0_46 = arith.constant 0 : index
    %c0_47 = arith.constant 0 : index
    %c0_48 = arith.constant 0 : index
    %62 = vector.load %arg3[%c0_46, %c0_47, %c0_48] : memref<2x1x128xi32, #tpu.memory_space<vmem>>, vector<2x1x128xi32>
    %63 = vector.broadcast %62 : vector<2x1x128xi32> to vector<2x16x128xi32>
    %64 = arith.cmpi eq, %61, %63 : vector<2x16x128xi32>
    %cst_49 = arith.constant 1.000000e+00 : f32
    %cst_50 = arith.constant 0.000000e+00 : f32
    %65 = vector.broadcast %cst_49 : f32 to vector<2x16x128xf32>
    %66 = vector.broadcast %cst_50 : f32 to vector<2x16x128xf32>
    %67 = arith.select %64, %65, %66 : vector<2x16x128xi1>, vector<2x16x128xf32>
    %68 = arith.truncf %67 : vector<2x16x128xf32> to vector<2x16x128xbf16>
    %c0_51 = arith.constant 0 : index
    %c0_52 = arith.constant 0 : index
    %c0_53 = arith.constant 0 : index
    %69 = vector.load %arg4[%c0_51, %c0_52, %c0_53] : memref<2x1x128xi32, #tpu.memory_space<vmem>>, vector<2x1x128xi32>
    %70 = vector.broadcast %69 : vector<2x1x128xi32> to vector<2x16x128xi32>
    %71 = arith.cmpi eq, %61, %70 : vector<2x16x128xi32>
    %cst_54 = arith.constant 1.000000e+00 : f32
    %cst_55 = arith.constant 0.000000e+00 : f32
    %72 = vector.broadcast %cst_54 : f32 to vector<2x16x128xf32>
    %73 = vector.broadcast %cst_55 : f32 to vector<2x16x128xf32>
    %74 = arith.select %71, %72, %73 : vector<2x16x128xi1>, vector<2x16x128xf32>
    %75 = arith.truncf %74 : vector<2x16x128xf32> to vector<2x16x128xbf16>
    %cst_56 = arith.constant dense<0.000000e+00> : vector<2x128x128xf32>
    %76 = tpu.matmul %68, %56, %cst_56 {dimension_numbers = #tpu.dot_dimension_numbers<[1], [1], [2], [2], [0, 0, 0, 2, 1, 2], [0], [0]>} : vector<2x16x128xbf16>, vector<2x16x128xbf16>, vector<2x128x128xf32> -> vector<2x128x128xf32>
    %cst_57 = arith.constant dense<0.000000e+00> : vector<2x128x128xf32>
    %77 = tpu.matmul %75, %60, %cst_57 {dimension_numbers = #tpu.dot_dimension_numbers<[1], [1], [2], [2], [0, 0, 0, 2, 1, 2], [0], [0]>} : vector<2x16x128xbf16>, vector<2x16x128xbf16>, vector<2x128x128xf32> -> vector<2x128x128xf32>
    %78 = arith.addf %76, %77 : vector<2x128x128xf32>
    %c0_58 = arith.constant 0 : index
    %c0_59 = arith.constant 0 : index
    %79 = vector.load %arg11[%c0_58, %c0_59] : memref<1x128xf32, #tpu.memory_space<vmem>>, vector<1x128xf32>
    %80 = vector.shape_cast %79 : vector<1x128xf32> to vector<1x1x128xf32>
    %81 = vector.broadcast %80 : vector<1x1x128xf32> to vector<2x128x128xf32>
    %82 = arith.addf %78, %81 : vector<2x128x128xf32>
    %cst_60 = arith.constant 0.000000e+00 : f32
    %83 = vector.broadcast %cst_60 : f32 to vector<2x128x128xf32>
    %84 = arith.maximumf %82, %83 : vector<2x128x128xf32>
    %c0_61 = arith.constant 0 : index
    %c0_62 = arith.constant 0 : index
    %85 = vector.load %arg12[%c0_61, %c0_62] : memref<1x128xf32, #tpu.memory_space<vmem>>, vector<1x128xf32>
    %86 = vector.shape_cast %85 : vector<1x128xf32> to vector<1x1x128xf32>
    %87 = vector.broadcast %86 : vector<1x1x128xf32> to vector<2x128x128xf32>
    %88 = arith.mulf %84, %87 : vector<2x128x128xf32>
    %cst_63 = arith.constant dense<0.000000e+00> : vector<2x128xf32>
    %89 = vector.multi_reduction <add>, %88, %cst_63 [2] : vector<2x128x128xf32> to vector<2x128xf32>
    %c0_64 = arith.constant 0 : index
    %c0_65 = arith.constant 0 : index
    %90 = vector.load %arg13[%c0_64, %c0_65] : memref<1x1xf32, #tpu.memory_space<vmem>>, vector<1x1xf32>
    %91 = vector.broadcast %90 : vector<1x1xf32> to vector<2x128xf32>
    %92 = arith.addf %89, %91 : vector<2x128xf32>
    %c0_66 = arith.constant 0 : index
    %c0_67 = arith.constant 0 : index
    %c0_68 = arith.constant 0 : index
    %93 = vector.load %arg14[%c0_66, %c0_67, %c0_68] : memref<1x2x128xf32, #tpu.memory_space<vmem>>, vector<1x2x128xf32>
    %94 = vector.shape_cast %93 : vector<1x2x128xf32> to vector<2x128xf32>
    %95 = vector.shape_cast %92 : vector<2x128xf32> to vector<1x2x128xf32>
    tpu.vector_store %arg14[%c0_66, %c0_67, %c0_68], %95 {strides = array<i32>} : memref<1x2x128xf32, #tpu.memory_space<vmem>>, vector<1x2x128xf32>,
    return
  }
  func.func @transform_0(%arg0: i32) -> (i32, i32, i32) {
    %c0_i32 = arith.constant 0 : i32
    %c0_i32_0 = arith.constant 0 : i32
    %c0_i32_1 = arith.constant 0 : i32
    return %arg0, %c0_i32, %c0_i32_0 : i32, i32, i32
  }
  func.func @transform_1(%arg0: i32) -> (i32, i32, i32) {
    %c0_i32 = arith.constant 0 : i32
    %c0_i32_0 = arith.constant 0 : i32
    %c0_i32_1 = arith.constant 0 : i32
    return %arg0, %c0_i32, %c0_i32_0 : i32, i32, i32
  }
  func.func @transform_2(%arg0: i32) -> (i32, i32, i32) {
    %c0_i32 = arith.constant 0 : i32
    %c0_i32_0 = arith.constant 0 : i32
    %c0_i32_1 = arith.constant 0 : i32
    return %arg0, %c0_i32, %c0_i32_0 : i32, i32, i32
  }
  func.func @transform_3(%arg0: i32) -> (i32, i32, i32) {
    %c0_i32 = arith.constant 0 : i32
    %c0_i32_0 = arith.constant 0 : i32
    %c0_i32_1 = arith.constant 0 : i32
    return %arg0, %c0_i32, %c0_i32_0 : i32, i32, i32
  }
  func.func @transform_4(%arg0: i32) -> (i32, i32) {
    %c0_i32 = arith.constant 0 : i32
    %c0_i32_0 = arith.constant 0 : i32
    %c0_i32_1 = arith.constant 0 : i32
    return %c0_i32, %c0_i32_0 : i32, i32
  }
  func.func @transform_5(%arg0: i32) -> (i32, i32) {
    %c0_i32 = arith.constant 0 : i32
    %c0_i32_0 = arith.constant 0 : i32
    %c0_i32_1 = arith.constant 0 : i32
    return %c0_i32, %c0_i32_0 : i32, i32
  }
  func.func @transform_6(%arg0: i32) -> (i32, i32, i32) {
    %c0_i32 = arith.constant 0 : i32
    %c0_i32_0 = arith.constant 0 : i32
    %c0_i32_1 = arith.constant 0 : i32
    %c0_i32_2 = arith.constant 0 : i32
    return %c0_i32, %c0_i32_0, %c0_i32_1 : i32, i32, i32
  }
  func.func @transform_7(%arg0: i32) -> (i32, i32, i32) {
    %c0_i32 = arith.constant 0 : i32
    %c0_i32_0 = arith.constant 0 : i32
    %c0_i32_1 = arith.constant 0 : i32
    %c0_i32_2 = arith.constant 0 : i32
    return %c0_i32, %c0_i32_0, %c0_i32_1 : i32, i32, i32
  }
  func.func @transform_8(%arg0: i32) -> (i32, i32) {
    %c0_i32 = arith.constant 0 : i32
    %c0_i32_0 = arith.constant 0 : i32
    %c0_i32_1 = arith.constant 0 : i32
    return %c0_i32, %c0_i32_0 : i32, i32
  }
  func.func @transform_9(%arg0: i32) -> (i32, i32) {
    %c0_i32 = arith.constant 0 : i32
    %c0_i32_0 = arith.constant 0 : i32
    %c0_i32_1 = arith.constant 0 : i32
    return %c0_i32, %c0_i32_0 : i32, i32
  }
  func.func @transform_10(%arg0: i32) -> (i32, i32) {
    %c0_i32 = arith.constant 0 : i32
    %c0_i32_0 = arith.constant 0 : i32
    %c0_i32_1 = arith.constant 0 : i32
    return %c0_i32, %c0_i32_0 : i32, i32
  }
  func.func @transform_11(%arg0: i32) -> (i32, i32) {
    %c0_i32 = arith.constant 0 : i32
    %c0_i32_0 = arith.constant 0 : i32
    %c0_i32_1 = arith.constant 0 : i32
    return %c0_i32, %c0_i32_0 : i32, i32
  }
  func.func @transform_12(%arg0: i32) -> (i32, i32) {
    %c0_i32 = arith.constant 0 : i32
    %c0_i32_0 = arith.constant 0 : i32
    %c0_i32_1 = arith.constant 0 : i32
    return %c0_i32, %c0_i32_0 : i32, i32
  }
  func.func @transform_13(%arg0: i32) -> (i32, i32, i32) {
    %c0_i32 = arith.constant 0 : i32
    %c0_i32_0 = arith.constant 0 : i32
    %c0_i32_1 = arith.constant 0 : i32
    return %arg0, %c0_i32, %c0_i32_0 : i32, i32, i32
  }
}

</mosaic_0001>

<llo_original>
// kernel: tpu_custom_call.1
$region0: #{tpu_custom_call.1}
  #allocation0 [shape = 'u32[]', space=smem, size = 0x4, offset = 0x4, fixed_abs, tag = 'smem constant byte address 0x4 - core index']
  #allocation1 [shape = 'u32[144,128]{1,0:T(1,128)}', space=vmem, size = 0x12000, scoped, tag = 'internal scratch']
  #allocation2 [shape = 'f32[1,1]{1,0:T(1,128)S(1)}', space=vmem, size = 0x200, scoped, tag = 'scoped memory for tpu_custom_call.1']
  %s0 = inlined_call_operand.hbm [shape: bf16[4,16,128], index: 0, kind: input, shape index: {}]
  %s1 = inlined_call_operand.hbm [shape: bf16[4,16,16], index: 1, kind: input, shape index: {}]
  %s2 = inlined_call_operand.vmem [shape: s32[4,1,128], index: 2, kind: input, shape index: {}]
  %s3 = inlined_call_operand.vmem [shape: s32[4,1,128], index: 3, kind: input, shape index: {}]
  %s4 = inlined_call_operand.hbm [shape: bf16[128,128], index: 4, kind: input, shape index: {}]
  %s5 = inlined_call_operand.vmem [shape: f32[1,128], index: 5, kind: input, shape index: {}]
  %s6 = inlined_call_operand.hbm [shape: bf16[3,128,128], index: 6, kind: input, shape index: {}]
  %s7 = inlined_call_operand.vmem [shape: f32[3,1,128], index: 7, kind: input, shape index: {}]
  %s8 = inlined_call_operand.hbm [shape: bf16[128,128], index: 8, kind: input, shape index: {}]
  %s9 = inlined_call_operand.hbm [shape: bf16[128,128], index: 9, kind: input, shape index: {}]
  %s10 = inlined_call_operand.vmem [shape: f32[1,128], index: 10, kind: input, shape index: {}]
  %s11 = inlined_call_operand.vmem [shape: f32[1,128], index: 11, kind: input, shape index: {}]
  %s12 = inlined_call_operand.<no memory space> [shape: f32[1,1], index: 12, kind: input, shape index: {}]
  %s13 = inlined_call_operand.hbm [shape: f32[2,2,128], index: 13, kind: output, shape index: {}]
  %s14 = sld [smem:[#allocation0]]
  $region109: #{tpu_custom_call.1} parent=0
    _
  %s16 = ssub.s32 1, %s14
  %s17 = scalar_select 0, %s16, %s14
  %v18 = vstv %s12
  %19 = vst [vmem:[#allocation2] sm:$0x1] %v18
  $region1: #{tpu_custom_call.1} parent=0
    #allocation3 [shape = 'u8[16384]{0}', space=vmem, size = 0x4000, scoped, tag = 'input window, operand 0']
    #allocation4 [shape = 's32[2]{0}', space=sflag, size = 0x8, scoped, tag = 'scoped memory for tpu_custom_call.1']
    #allocation5 [shape = 's32[2]{0}', space=sflag, size = 0x8, scoped, tag = 'scoped memory for tpu_custom_call.1']
    #allocation6 [shape = 'u8[16384]{0}', space=vmem, size = 0x4000, scoped, tag = 'input window, operand 1']
    #allocation7 [shape = 's32[2]{0}', space=sflag, size = 0x8, scoped, tag = 'scoped memory for tpu_custom_call.1']
    #allocation8 [shape = 'u8[32768]{0}', space=vmem, size = 0x8000, scoped, tag = 'input window, operand 4, single buffered']
    #allocation9 [shape = 'u8[98304]{0}', space=vmem, size = 0x18000, scoped, tag = 'input window, operand 6, single buffered']
    #allocation10 [shape = 's32[1]{0}', space=sflag, size = 0x4, scoped, tag = 'scoped memory for tpu_custom_call.1']
    #allocation11 [shape = 'u8[32768]{0}', space=vmem, size = 0x8000, scoped, tag = 'input window, operand 8, single buffered']
    #allocation12 [shape = 'u8[32768]{0}', space=vmem, size = 0x8000, scoped, tag = 'input window, operand 9, single buffered']
    #allocation13 [shape = 's32[1]{0}', space=sflag, size = 0x4, scoped, tag = 'scoped memory for tpu_custom_call.1']
    #allocation14 [shape = 'u8[2048]{0}', space=vmem, size = 0x800, scoped, tag = 'output window, operand 0']
    %20 = vsyncpa [#allocation4], 0
    %s21 = scalar_lea.sflag [#allocation4], 1
    %22 = vsyncpa %s21, 0
    %23 = vsyncpa [#allocation7], 0
    %s24 = scalar_lea.sflag [#allocation7], 1
    %25 = vsyncpa %s24, 0
    %26 = vsyncpa [#allocation10], 0
    %27 = vsyncpa [#allocation13], 0
    %28 = vsyncpa [#allocation5], 0
    %s29 = scalar_lea.sflag [#allocation5], 1
    %30 = vsyncpa %s29, 0
    loop: start=0, step=1, limit=4
    $region2: #{tpu_custom_call.1} parent=1 // loop_pre_header
      _
    $region3: #{tpu_custom_call.1} parent=1 // loop_header
      %s32 = sphi 0, %s36
      %p33 = scmp.ge.s32.totalorder %s32, 4
      %s42 = sphi 0, %s44
      %s45 = sphi 0, %s42
      %s46 = sphi 0, %s45
      %s62 = sphi 0, %s46
      %s68 = sphi 0, %s70
      %s71 = sphi 0, %s68
      %s72 = sphi 0, %s71
      %s88 = sphi 0, %s72
      %s94 = sphi 0, %s96
      %s97 = sphi 0, %s94
      %s98 = sphi 0, %s97
      %s114 = sphi 0, %s98
      %s120 = sphi 0, %s122
      %s123 = sphi 0, %s120
      %s124 = sphi 0, %s123
      %s140 = sphi 0, %s124
      %s144 = sphi 0, %s144
      %s146 = sphi 0, %s144
      %s147 = sphi 0, %s146
      %s161 = sphi 0, %s147
      %s165 = sphi 0, %s165
      %s167 = sphi 0, %s165
      %s168 = sphi 0, %s167
      %s182 = sphi 0, %s168
      %s186 = sphi 0, %s186
      %s188 = sphi 0, %s186
      %s189 = sphi 0, %s188
      %s203 = sphi 0, %s189
      %s207 = sphi 0, %s207
      %s209 = sphi 0, %s207
      %s210 = sphi 0, %s209
      %s224 = sphi 0, %s210
      %s228 = sphi 0, %s228
      %s230 = sphi 0, %s228
      %s231 = sphi 0, %s230
      %s245 = sphi 0, %s231
      %s249 = sphi 0, %s249
      %s251 = sphi 0, %s249
      %s252 = sphi 0, %s251
      %s266 = sphi 0, %s252
      %s270 = sphi 0, %s270
      %s272 = sphi 0, %s270
      %s273 = sphi 0, %s272
      %s287 = sphi 0, %s273
      %s291 = sphi 0, %s291
      %s293 = sphi 0, %s291
      %s294 = sphi 0, %s293
      %s308 = sphi 0, %s294
      %s312 = sphi 0, %s312
      %s314 = sphi 0, %s312
      %s315 = sphi 0, %s314
      %s329 = sphi 0, %s315
      %s335 = sphi 0, %s337
      %s338 = sphi 0, %s335
      %s339 = sphi 0, %s338
      %s355 = sphi 0, %s339
    $region4: #{tpu_custom_call.1} parent=1 // loop_header_branch
      %35 = sbr.rel (%p33) target = $region8
    $region5: #{tpu_custom_call.1} parent=1 // loop_body
      %s37 = ssub.s32 %s32, 1
      %s38 = ssub.s32 %s32, 2
      %s39 = sadd.s32 %s32, 1
      %s40 = ssub.s32 %s32, %s39
      %p41 = scmp.eq.s32.totalorder %s40, 0
      %s43 = sadd.s32 %s42, 1
      %s44 = scalar_select %p41, %s42, %s43
      %p47 = pneg %p41
      %p48 = scmp.eq.s32.totalorder %s32, 1
      %p49 = por %p47, %p48
      %p50 = scmp.ne.s32.totalorder %s42, %s45
      %p51 = scmp.eq.s32.totalorder %s32, 0
      %p52 = por %p50, %p51
      %p53 = scmp.ne.s32.totalorder %s42, %s45
      %p54 = scmp.eq.s32.totalorder %s37, 1
      %p55 = por %p53, %p54
      %p56 = scmp.ne.s32.totalorder %s45, %s46
      %p57 = scmp.eq.s32.totalorder %s37, 0
      %p58 = por %p56, %p57
      %p59 = scmp.ne.s32.totalorder %s45, %s46
      %p60 = scmp.eq.s32.totalorder %s38, 1
      %p61 = por %p59, %p60
      %p63 = scmp.ne.s32.totalorder %s46, %s62
      %p64 = scmp.eq.s32.totalorder %s38, 0
      %p65 = por %p63, %p64
      %s66 = ssub.s32 %s32, %s39
      %p67 = scmp.eq.s32.totalorder %s66, 0
      %s69 = sadd.s32 %s68, 1
      %s70 = scalar_select %p67, %s68, %s69
      %p73 = pneg %p67
      %p74 = scmp.eq.s32.totalorder %s32, 1
      %p75 = por %p73, %p74
      %p76 = scmp.ne.s32.totalorder %s68, %s71
      %p77 = scmp.eq.s32.totalorder %s32, 0
      %p78 = por %p76, %p77
      %p79 = scmp.ne.s32.totalorder %s68, %s71
      %p80 = scmp.eq.s32.totalorder %s37, 1
      %p81 = por %p79, %p80
      %p82 = scmp.ne.s32.totalorder %s71, %s72
      %p83 = scmp.eq.s32.totalorder %s37, 0
      %p84 = por %p82, %p83
      %p85 = scmp.ne.s32.totalorder %s71, %s72
      %p86 = scmp.eq.s32.totalorder %s38, 1
      %p87 = por %p85, %p86
      %p89 = scmp.ne.s32.totalorder %s72, %s88
      %p90 = scmp.eq.s32.totalorder %s38, 0
      %p91 = por %p89, %p90
      %s92 = ssub.s32 %s32, %s39
      %p93 = scmp.eq.s32.totalorder %s92, 0
      %s95 = sadd.s32 %s94, 1
      %s96 = scalar_select %p93, %s94, %s95
      %p99 = pneg %p93
      %p100 = scmp.eq.s32.totalorder %s32, 1
      %p101 = por %p99, %p100
      %p102 = scmp.ne.s32.totalorder %s94, %s97
      %p103 = scmp.eq.s32.totalorder %s32, 0
      %p104 = por %p102, %p103
      %p105 = scmp.ne.s32.totalorder %s94, %s97
      %p106 = scmp.eq.s32.totalorder %s37, 1
      %p107 = por %p105, %p106
      %p108 = scmp.ne.s32.totalorder %s97, %s98
      %p109 = scmp.eq.s32.totalorder %s37, 0
      %p110 = por %p108, %p109
      %p111 = scmp.ne.s32.totalorder %s97, %s98
      %p112 = scmp.eq.s32.totalorder %s38, 1
      %p113 = por %p111, %p112
      %p115 = scmp.ne.s32.totalorder %s98, %s114
      %p116 = scmp.eq.s32.totalorder %s38, 0
      %p117 = por %p115, %p116
      %s118 = ssub.s32 %s32, %s39
      %p119 = scmp.eq.s32.totalorder %s118, 0
      %s121 = sadd.s32 %s120, 1
      %s122 = scalar_select %p119, %s120, %s121
      %p125 = pneg %p119
      %p126 = scmp.eq.s32.totalorder %s32, 1
      %p127 = por %p125, %p126
      %p128 = scmp.ne.s32.totalorder %s120, %s123
      %p129 = scmp.eq.s32.totalorder %s32, 0
      %p130 = por %p128, %p129
      %p131 = scmp.ne.s32.totalorder %s120, %s123
      %p132 = scmp.eq.s32.totalorder %s37, 1
      %p133 = por %p131, %p132
      %p134 = scmp.ne.s32.totalorder %s123, %s124
      %p135 = scmp.eq.s32.totalorder %s37, 0
      %p136 = por %p134, %p135
      %p137 = scmp.ne.s32.totalorder %s123, %s124
      %p138 = scmp.eq.s32.totalorder %s38, 1
      %p139 = por %p137, %p138
      %p141 = scmp.ne.s32.totalorder %s124, %s140
      %p142 = scmp.eq.s32.totalorder %s38, 0
      %p143 = por %p141, %p142
      %s145 = sadd.s32 %s144, 1
      %p148 = scmp.eq.s32.totalorder %s32, 1
      %p149 = scmp.ne.s32.totalorder %s144, %s146
      %p150 = scmp.eq.s32.totalorder %s32, 0
      %p151 = por %p149, %p150
      %p152 = scmp.ne.s32.totalorder %s144, %s146
      %p153 = scmp.eq.s32.totalorder %s37, 1
      %p154 = por %p152, %p153
      %p155 = scmp.ne.s32.totalorder %s146, %s147
      %p156 = scmp.eq.s32.totalorder %s37, 0
      %p157 = por %p155, %p156
      %p158 = scmp.ne.s32.totalorder %s146, %s147
      %p159 = scmp.eq.s32.totalorder %s38, 1
      %p160 = por %p158, %p159
      %p162 = scmp.ne.s32.totalorder %s147, %s161
      %p163 = scmp.eq.s32.totalorder %s38, 0
      %p164 = por %p162, %p163
      %s166 = sadd.s32 %s165, 1
      %p169 = scmp.eq.s32.totalorder %s32, 1
      %p170 = scmp.ne.s32.totalorder %s165, %s167
      %p171 = scmp.eq.s32.totalorder %s32, 0
      %p172 = por %p170, %p171
      %p173 = scmp.ne.s32.totalorder %s165, %s167
      %p174 = scmp.eq.s32.totalorder %s37, 1
      %p175 = por %p173, %p174
      %p176 = scmp.ne.s32.totalorder %s167, %s168
      %p177 = scmp.eq.s32.totalorder %s37, 0
      %p178 = por %p176, %p177
      %p179 = scmp.ne.s32.totalorder %s167, %s168
      %p180 = scmp.eq.s32.totalorder %s38, 1
      %p181 = por %p179, %p180
      %p183 = scmp.ne.s32.totalorder %s168, %s182
      %p184 = scmp.eq.s32.totalorder %s38, 0
      %p185 = por %p183, %p184
      %s187 = sadd.s32 %s186, 1
      %p190 = scmp.eq.s32.totalorder %s32, 1
      %p191 = scmp.ne.s32.totalorder %s186, %s188
      %p192 = scmp.eq.s32.totalorder %s32, 0
      %p193 = por %p191, %p192
      %p194 = scmp.ne.s32.totalorder %s186, %s188
      %p195 = scmp.eq.s32.totalorder %s37, 1
      %p196 = por %p194, %p195
      %p197 = scmp.ne.s32.totalorder %s188, %s189
      %p198 = scmp.eq.s32.totalorder %s37, 0
      %p199 = por %p197, %p198
      %p200 = scmp.ne.s32.totalorder %s188, %s189
      %p201 = scmp.eq.s32.totalorder %s38, 1
      %p202 = por %p200, %p201
      %p204 = scmp.ne.s32.totalorder %s189, %s203
      %p205 = scmp.eq.s32.totalorder %s38, 0
      %p206 = por %p204, %p205
      %s208 = sadd.s32 %s207, 1
      %p211 = scmp.eq.s32.totalorder %s32, 1
      %p212 = scmp.ne.s32.totalorder %s207, %s209
      %p213 = scmp.eq.s32.totalorder %s32, 0
      %p214 = por %p212, %p213
      %p215 = scmp.ne.s32.totalorder %s207, %s209
      %p216 = scmp.eq.s32.totalorder %s37, 1
      %p217 = por %p215, %p216
      %p218 = scmp.ne.s32.totalorder %s209, %s210
      %p219 = scmp.eq.s32.totalorder %s37, 0
      %p220 = por %p218, %p219
      %p221 = scmp.ne.s32.totalorder %s209, %s210
      %p222 = scmp.eq.s32.totalorder %s38, 1
      %p223 = por %p221, %p222
      %p225 = scmp.ne.s32.totalorder %s210, %s224
      %p226 = scmp.eq.s32.totalorder %s38, 0
      %p227 = por %p225, %p226
      %s229 = sadd.s32 %s228, 1
      %p232 = scmp.eq.s32.totalorder %s32, 1
      %p233 = scmp.ne.s32.totalorder %s228, %s230
      %p234 = scmp.eq.s32.totalorder %s32, 0
      %p235 = por %p233, %p234
      %p236 = scmp.ne.s32.totalorder %s228, %s230
      %p237 = scmp.eq.s32.totalorder %s37, 1
      %p238 = por %p236, %p237
      %p239 = scmp.ne.s32.totalorder %s230, %s231
      %p240 = scmp.eq.s32.totalorder %s37, 0
      %p241 = por %p239, %p240
      %p242 = scmp.ne.s32.totalorder %s230, %s231
      %p243 = scmp.eq.s32.totalorder %s38, 1
      %p244 = por %p242, %p243
      %p246 = scmp.ne.s32.totalorder %s231, %s245
      %p247 = scmp.eq.s32.totalorder %s38, 0
      %p248 = por %p246, %p247
      %s250 = sadd.s32 %s249, 1
      %p253 = scmp.eq.s32.totalorder %s32, 1
      %p254 = scmp.ne.s32.totalorder %s249, %s251
      %p255 = scmp.eq.s32.totalorder %s32, 0
      %p256 = por %p254, %p255
      %p257 = scmp.ne.s32.totalorder %s249, %s251
      %p258 = scmp.eq.s32.totalorder %s37, 1
      %p259 = por %p257, %p258
      %p260 = scmp.ne.s32.totalorder %s251, %s252
      %p261 = scmp.eq.s32.totalorder %s37, 0
      %p262 = por %p260, %p261
      %p263 = scmp.ne.s32.totalorder %s251, %s252
      %p264 = scmp.eq.s32.totalorder %s38, 1
      %p265 = por %p263, %p264
      %p267 = scmp.ne.s32.totalorder %s252, %s266
      %p268 = scmp.eq.s32.totalorder %s38, 0
      %p269 = por %p267, %p268
      %s271 = sadd.s32 %s270, 1
      %p274 = scmp.eq.s32.totalorder %s32, 1
      %p275 = scmp.ne.s32.totalorder %s270, %s272
      %p276 = scmp.eq.s32.totalorder %s32, 0
      %p277 = por %p275, %p276
      %p278 = scmp.ne.s32.totalorder %s270, %s272
      %p279 = scmp.eq.s32.totalorder %s37, 1
      %p280 = por %p278, %p279
      %p281 = scmp.ne.s32.totalorder %s272, %s273
      %p282 = scmp.eq.s32.totalorder %s37, 0
      %p283 = por %p281, %p282
      %p284 = scmp.ne.s32.totalorder %s272, %s273
      %p285 = scmp.eq.s32.totalorder %s38, 1
      %p286 = por %p284, %p285
      %p288 = scmp.ne.s32.totalorder %s273, %s287
      %p289 = scmp.eq.s32.totalorder %s38, 0
      %p290 = por %p288, %p289
      %s292 = sadd.s32 %s291, 1
      %p295 = scmp.eq.s32.totalorder %s32, 1
      %p296 = scmp.ne.s32.totalorder %s291, %s293
      %p297 = scmp.eq.s32.totalorder %s32, 0
      %p298 = por %p296, %p297
      %p299 = scmp.ne.s32.totalorder %s291, %s293
      %p300 = scmp.eq.s32.totalorder %s37, 1
      %p301 = por %p299, %p300
      %p302 = scmp.ne.s32.totalorder %s293, %s294
      %p303 = scmp.eq.s32.totalorder %s37, 0
      %p304 = por %p302, %p303
      %p305 = scmp.ne.s32.totalorder %s293, %s294
      %p306 = scmp.eq.s32.totalorder %s38, 1
      %p307 = por %p305, %p306
      %p309 = scmp.ne.s32.totalorder %s294, %s308
      %p310 = scmp.eq.s32.totalorder %s38, 0
      %p311 = por %p309, %p310
      %s313 = sadd.s32 %s312, 1
      %p316 = scmp.eq.s32.totalorder %s32, 1
      %p317 = scmp.ne.s32.totalorder %s312, %s314
      %p318 = scmp.eq.s32.totalorder %s32, 0
      %p319 = por %p317, %p318
      %p320 = scmp.ne.s32.totalorder %s312, %s314
      %p321 = scmp.eq.s32.totalorder %s37, 1
      %p322 = por %p320, %p321
      %p323 = scmp.ne.s32.totalorder %s314, %s315
      %p324 = scmp.eq.s32.totalorder %s37, 0
      %p325 = por %p323, %p324
      %p326 = scmp.ne.s32.totalorder %s314, %s315
      %p327 = scmp.eq.s32.totalorder %s38, 1
      %p328 = por %p326, %p327
      %p330 = scmp.ne.s32.totalorder %s315, %s329
      %p331 = scmp.eq.s32.totalorder %s38, 0
      %p332 = por %p330, %p331
      %s333 = ssub.s32 %s32, %s39
      %p334 = scmp.eq.s32.totalorder %s333, 0
      %s336 = sadd.s32 %s335, 1
      %s337 = scalar_select %p334, %s335, %s336
      %p340 = pneg %p334
      %p341 = scmp.eq.s32.totalorder %s32, 1
      %p342 = por %p340, %p341
      %p343 = scmp.ne.s32.totalorder %s335, %s338
      %p344 = scmp.eq.s32.totalorder %s32, 0
      %p345 = por %p343, %p344
      %p346 = scmp.ne.s32.totalorder %s335, %s338
      %p347 = scmp.eq.s32.totalorder %s37, 1
      %p348 = por %p346, %p347
      %p349 = scmp.ne.s32.totalorder %s338, %s339
      %p350 = scmp.eq.s32.totalorder %s37, 0
      %p351 = por %p349, %p350
      %p352 = scmp.ne.s32.totalorder %s338, %s339
      %p353 = scmp.eq.s32.totalorder %s38, 1
      %p354 = por %p352, %p353
      %p356 = scmp.ne.s32.totalorder %s339, %s355
      %p357 = scmp.eq.s32.totalorder %s38, 0
      %p358 = por %p356, %p357
      %p359 = scmp.le.s32.totalorder 1, %s32
      %p360 = scmp.lt.s32.totalorder %s32, 3
      %p361 = pnand %p359, %p360
      %p362 = pneg %p361
      // Predicated region
      $region9: #{tpu_custom_call.1} parent=5 // pred_check
        _
      $region10: #{tpu_custom_call.1} parent=5 // pred_check_branch
        %364 = sbr.rel (%p361) target = $region12
      $region11: #{tpu_custom_call.1} parent=5 // pred_region
        %s365 = ssub.s32 %s32, 1
        // Predicated region
        $region13: #{tpu_custom_call.1} parent=11 // pred_check
          %p366 = pneg %p157
        $region14: #{tpu_custom_call.1} parent=11 // pred_check_branch
          %368 = sbr.rel (%p366) target = $region16
        $region15: #{tpu_custom_call.1} parent=11 // pred_region
          %s370 = ssub.s32 1024, 1024
          %371 = vsyncadd [#allocation7], %s370
          %s372 = sshll.u32 [#allocation8], 4
          %s373 = int_to_ptr.vmem [resolvable:$true] %s372
          %378 = dma.hbm_to_vmem [thread:$0]  %s4, 1024, %s373, [#allocation7], 64, 64, 4
        $region16: #{tpu_custom_call.1} parent=11 // pred_fallthru
          _
        // Predicated region
        $region17: #{tpu_custom_call.1} parent=11 // pred_check
          %p379 = pneg %p178
        $region18: #{tpu_custom_call.1} parent=11 // pred_check_branch
          %381 = sbr.rel (%p379) target = $region20
        $region19: #{tpu_custom_call.1} parent=11 // pred_region
          _
        $region20: #{tpu_custom_call.1} parent=11 // pred_fallthru
          _
        // Predicated region
        $region21: #{tpu_custom_call.1} parent=11 // pred_check
          %p382 = pneg %p199
        $region22: #{tpu_custom_call.1} parent=11 // pred_check_branch
          %384 = sbr.rel (%p382) target = $region24
        $region23: #{tpu_custom_call.1} parent=11 // pred_region
          %s386 = ssub.s32 3072, 3072
          %387 = vsyncadd [#allocation10], %s386
          %s388 = sshll.u32 [#allocation9], 4
          %s389 = int_to_ptr.vmem [resolvable:$true] %s388
          %394 = dma.hbm_to_vmem [thread:$0]  %s6, 3072, %s389, [#allocation10], 64, 64, 4
        $region24: #{tpu_custom_call.1} parent=11 // pred_fallthru
          _
        // Predicated region
        $region25: #{tpu_custom_call.1} parent=11 // pred_check
          %p395 = pneg %p220
        $region26: #{tpu_custom_call.1} parent=11 // pred_check_branch
          %397 = sbr.rel (%p395) target = $region28
        $region27: #{tpu_custom_call.1} parent=11 // pred_region
          _
        $region28: #{tpu_custom_call.1} parent=11 // pred_fallthru
          _
        // Predicated region
        $region29: #{tpu_custom_call.1} parent=11 // pred_check
          %p398 = pneg %p241
        $region30: #{tpu_custom_call.1} parent=11 // pred_check_branch
          %400 = sbr.rel (%p398) target = $region32
        $region31: #{tpu_custom_call.1} parent=11 // pred_region
          %s402 = ssub.s32 1024, 1024
          %403 = vsyncadd [#allocation10], %s402
          %s404 = sshll.u32 [#allocation11], 4
          %s405 = int_to_ptr.vmem [resolvable:$true] %s404
          %410 = dma.hbm_to_vmem [thread:$0]  %s8, 1024, %s405, [#allocation10], 64, 64, 4
        $region32: #{tpu_custom_call.1} parent=11 // pred_fallthru
          _
        // Predicated region
        $region33: #{tpu_custom_call.1} parent=11 // pred_check
          %p411 = pneg %p262
        $region34: #{tpu_custom_call.1} parent=11 // pred_check_branch
          %413 = sbr.rel (%p411) target = $region36
        $region35: #{tpu_custom_call.1} parent=11 // pred_region
          %s415 = ssub.s32 1024, 1024
          %416 = vsyncadd [#allocation13], %s415
          %s417 = sshll.u32 [#allocation12], 4
          %s418 = int_to_ptr.vmem [resolvable:$true] %s417
          %423 = dma.hbm_to_vmem [thread:$0]  %s9, 1024, %s418, [#allocation13], 64, 64, 4
        $region36: #{tpu_custom_call.1} parent=11 // pred_fallthru
          _
        // Predicated region
        $region37: #{tpu_custom_call.1} parent=11 // pred_check
          %p424 = pneg %p283
        $region38: #{tpu_custom_call.1} parent=11 // pred_check_branch
          %426 = sbr.rel (%p424) target = $region40
        $region39: #{tpu_custom_call.1} parent=11 // pred_region
          _
        $region40: #{tpu_custom_call.1} parent=11 // pred_fallthru
          _
        // Predicated region
        $region41: #{tpu_custom_call.1} parent=11 // pred_check
          %p427 = pneg %p304
        $region42: #{tpu_custom_call.1} parent=11 // pred_check_branch
          %429 = sbr.rel (%p427) target = $region44
        $region43: #{tpu_custom_call.1} parent=11 // pred_region
          _
        $region44: #{tpu_custom_call.1} parent=11 // pred_fallthru
          _
        // Predicated region
        $region45: #{tpu_custom_call.1} parent=11 // pred_check
          %p430 = pneg %p325
        $region46: #{tpu_custom_call.1} parent=11 // pred_check_branch
          %432 = sbr.rel (%p430) target = $region48
        $region47: #{tpu_custom_call.1} parent=11 // pred_region
          _
        $region48: #{tpu_custom_call.1} parent=11 // pred_fallthru
          _
      $region12: #{tpu_custom_call.1} parent=5 // pred_fallthru
        _
      %p433 = scmp.lt.s32.totalorder %s32, 2
      // Predicated region
      $region49: #{tpu_custom_call.1} parent=5 // pred_check
        %p434 = pneg %p433
      $region50: #{tpu_custom_call.1} parent=5 // pred_check_branch
        %436 = sbr.rel (%p434) target = $region52
      $region51: #{tpu_custom_call.1} parent=5 // pred_region
        // Predicated region
        $region53: #{tpu_custom_call.1} parent=51 // pred_check
          %p437 = pneg %p52
        $region54: #{tpu_custom_call.1} parent=51 // pred_check_branch
          %439 = sbr.rel (%p437) target = $region56
        $region55: #{tpu_custom_call.1} parent=51 // pred_region
          %s440 = sand.u32 %s42, 1
          %s441 = scalar_lea.sflag [#allocation4], %s440
          %s442 = sand.u32 %s42, 1
          %s443 = smul.addr %s442, 16
          %s444 = scalar_lea.vmem [#allocation3], %s443
          %s445 = smul.u32 2, %s32
          %s447 = ssub.s32 256, 256
          %448 = vsyncadd %s441, %s447
          %s449 = smul.addr %s445, 2
          %s450 = smul.addr %s449, 64
          %s451 = scalar_lea.hbm %s0, %s450
          %s452 = sshll.u32 %s444, 4
          %s453 = int_to_ptr.vmem [resolvable:$true] %s452
          %458 = dma.hbm_to_vmem [thread:$0]  %s451, 256, %s453, %s441, 64, 64, 4
        $region56: #{tpu_custom_call.1} parent=51 // pred_fallthru
          _
        // Predicated region
        $region57: #{tpu_custom_call.1} parent=51 // pred_check
          %p459 = pneg %p78
        $region58: #{tpu_custom_call.1} parent=51 // pred_check_branch
          %461 = sbr.rel (%p459) target = $region60
        $region59: #{tpu_custom_call.1} parent=51 // pred_region
          %s462 = sand.u32 %s32, 1
          %s463 = scalar_lea.sflag [#allocation7], %s462
          %s464 = sand.u32 %s68, 1
          %s465 = smul.addr %s464, 16
          %s466 = scalar_lea.vmem [#allocation6], %s465
          %s467 = smul.u32 2, %s32
          %s469 = ssub.s32 256, 256
          %470 = vsyncadd %s463, %s469
          %s471 = smul.addr %s467, 2
          %s472 = smul.addr %s471, 64
          %s473 = scalar_lea.hbm %s1, %s472
          %s474 = sshll.u32 %s466, 4
          %s475 = int_to_ptr.vmem [resolvable:$true] %s474
          %480 = dma.hbm_to_vmem [thread:$0]  %s473, 256, %s475, %s463, 64, 64, 4
        $region60: #{tpu_custom_call.1} parent=51 // pred_fallthru
          _
        // Predicated region
        $region61: #{tpu_custom_call.1} parent=51 // pred_check
          %p481 = pneg %p104
        $region62: #{tpu_custom_call.1} parent=51 // pred_check_branch
          %483 = sbr.rel (%p481) target = $region64
        $region63: #{tpu_custom_call.1} parent=51 // pred_region
          %s484 = smul.u32 2, %s32
          %p485 = scmp.lt.s32.totalorder %s484, 3
          %s486 = scalar_select %p485, %s484, 3
          %s487 = scalar_lea.vmem %s2, %s486
          %s488 = smul.u32 2, %s32
        $region64: #{tpu_custom_call.1} parent=51 // pred_fallthru
          _
        // Predicated region
        $region65: #{tpu_custom_call.1} parent=51 // pred_check
          %p489 = pneg %p130
        $region66: #{tpu_custom_call.1} parent=51 // pred_check_branch
          %491 = sbr.rel (%p489) target = $region68
        $region67: #{tpu_custom_call.1} parent=51 // pred_region
          %s492 = smul.u32 2, %s32
          %p493 = scmp.lt.s32.totalorder %s492, 3
          %s494 = scalar_select %p493, %s492, 3
          %s495 = scalar_lea.vmem %s3, %s494
          %s496 = smul.u32 2, %s32
        $region68: #{tpu_custom_call.1} parent=51 // pred_fallthru
          _
      $region52: #{tpu_custom_call.1} parent=5 // pred_fallthru
        _
      %p497 = scmp.le.s32.totalorder 1, %s32
      %p498 = scmp.lt.s32.totalorder %s32, 3
      %p499 = pnand %p497, %p498
      %p500 = pneg %p499
      // Predicated region
      $region69: #{tpu_custom_call.1} parent=5 // pred_check
        _
      $region70: #{tpu_custom_call.1} parent=5 // pred_check_branch
        %502 = sbr.rel (%p499) target = $region72
      $region71: #{tpu_custom_call.1} parent=5 // pred_region
        %s503 = ssub.s32 %s32, 1
        %s504 = sand.u32 %s45, 1
        %s505 = scalar_lea.sflag [#allocation4], %s504
        %s506 = sand.u32 %s45, 1
        %s507 = smul.addr %s506, 16
        %s508 = scalar_lea.vmem [#allocation3], %s507
        // Predicated region
        $region73: #{tpu_custom_call.1} parent=71 // pred_check
          %p509 = pneg %p58
        $region74: #{tpu_custom_call.1} parent=71 // pred_check_branch
          %511 = sbr.rel (%p509) target = $region76
        $region75: #{tpu_custom_call.1} parent=71 // pred_region
          %512 = dma.done %s505, 256
        $region76: #{tpu_custom_call.1} parent=71 // pred_fallthru
          _
        %s513 = sand.u32 %s37, 1
        %s514 = scalar_lea.sflag [#allocation7], %s513
        %s515 = sand.u32 %s71, 1
        %s516 = smul.addr %s515, 16
        %s517 = scalar_lea.vmem [#allocation6], %s516
        // Predicated region
        $region77: #{tpu_custom_call.1} parent=71 // pred_check
          %p518 = pneg %p84
        $region78: #{tpu_custom_call.1} parent=71 // pred_check_branch
          %520 = sbr.rel (%p518) target = $region80
        $region79: #{tpu_custom_call.1} parent=71 // pred_region
          %521 = dma.done %s514, 256
        $region80: #{tpu_custom_call.1} parent=71 // pred_fallthru
          _
        // Predicated region
        $region81: #{tpu_custom_call.1} parent=71 // pred_check
          %p522 = pneg %p157
        $region82: #{tpu_custom_call.1} parent=71 // pred_check_branch
          %524 = sbr.rel (%p522) target = $region84
        $region83: #{tpu_custom_call.1} parent=71 // pred_region
          %525 = dma.done [#allocation7], 1024
        $region84: #{tpu_custom_call.1} parent=71 // pred_fallthru
          _
        // Predicated region
        $region85: #{tpu_custom_call.1} parent=71 // pred_check
          %p526 = pneg %p199
        $region86: #{tpu_custom_call.1} parent=71 // pred_check_branch
          %528 = sbr.rel (%p526) target = $region88
        $region87: #{tpu_custom_call.1} parent=71 // pred_region
          %529 = dma.done [#allocation10], 3072
        $region88: #{tpu_custom_call.1} parent=71 // pred_fallthru
          _
        // Predicated region
        $region89: #{tpu_custom_call.1} parent=71 // pred_check
          %p530 = pneg %p241
        $region90: #{tpu_custom_call.1} parent=71 // pred_check_branch
          %532 = sbr.rel (%p530) target = $region92
        $region91: #{tpu_custom_call.1} parent=71 // pred_region
          %533 = dma.done [#allocation10], 1024
        $region92: #{tpu_custom_call.1} parent=71 // pred_fallthru
          _
        // Predicated region
        $region93: #{tpu_custom_call.1} parent=71 // pred_check
          %p534 = pneg %p262
        $region94: #{tpu_custom_call.1} parent=71 // pred_check_branch
          %536 = sbr.rel (%p534) target = $region96
        $region95: #{tpu_custom_call.1} parent=71 // pred_region
          %537 = dma.done [#allocation13], 1024
        $region96: #{tpu_custom_call.1} parent=71 // pred_fallthru
          _
        %s538 = sand.u32 %s45, 1
        %s539 = scalar_lea.sflag [#allocation4], %s538
        %s540 = sand.u32 %s45, 1
        %s541 = smul.addr %s540, 16
        %s542 = scalar_lea.vmem [#allocation3], %s541
        %p543 = pneg %p58
        %p544 = pneg %p55
        %s545 = sand.u32 %s37, 1
        %s546 = scalar_lea.sflag [#allocation7], %s545
        %s547 = sand.u32 %s71, 1
        %s548 = smul.addr %s547, 16
        %s549 = scalar_lea.vmem [#allocation6], %s548
        %p550 = pneg %p84
        %p551 = pneg %p81
        %s552 = smul.u32 2, %s37
        %p553 = scmp.lt.s32.totalorder %s552, 3
        %s554 = scalar_select %p553, %s552, 3
        %s555 = scalar_lea.vmem %s2, %s554
        %p556 = pneg %p110
        %p557 = pneg %p107
        %s558 = smul.u32 2, %s37
        %p559 = scmp.lt.s32.totalorder %s558, 3
        %s560 = scalar_select %p559, %s558, 3
        %s561 = scalar_lea.vmem %s3, %s560
        %p562 = pneg %p136
        %p563 = pneg %p133
        %p564 = pneg %p157
        %p565 = pneg %p154
        %p566 = pneg %p178
        %p567 = pneg %p175
        %p568 = pneg %p199
        %p569 = pneg %p196
        %p570 = pneg %p220
        %p571 = pneg %p217
        %p572 = pneg %p241
        %p573 = pneg %p238
        %p574 = pneg %p262
        %p575 = pneg %p259
        %p576 = pneg %p283
        %p577 = pneg %p280
        %p578 = pneg %p304
        %p579 = pneg %p301
        %p580 = pneg %p325
        %p581 = pneg %p322
        %p582 = pneg %p351
        %p583 = pneg %p348
        %s584 = sand.u32 %s338, 1
        %s585 = scalar_lea.sflag [#allocation5], %s584
        %s586 = sand.u32 %s338, 1
        %s587 = smul.addr %s586, 2
        %s588 = scalar_lea.vmem [#allocation14], %s587
        %s589 = smul.u32 2, %s37
        %s590 = smul.u32 2, %s37
        %s591 = smul.u32 2, %s37
        %p592 = scmp.lt.s32.totalorder %s591, 3
        %s593 = scalar_select %p592, %s591, 3
        %s594 = scalar_lea.vmem %s2, %s593
        %s595 = smul.u32 2, %s37
        %s596 = smul.u32 2, %s37
        %p597 = scmp.lt.s32.totalorder %s596, 3
        %s598 = scalar_select %p597, %s596, 3
        %s599 = scalar_lea.vmem %s3, %s598
        %s600 = smul.u32 2, %s37
        %v602 = vld [vmem:[%s508] sm:$0xf]
        %v603 = vld [vmem:[%s508 + $0x4] sm:$0xf]
        %v604 = vld [vmem:[%s508 + $0x8] sm:$0xf]
        %v605 = vld [vmem:[%s508 + $0xc] sm:$0xf]
        %v606 = vld [vmem:[#allocation8] sm:$0xf]
        %v607 = vld [vmem:[#allocation8 + $0x4] sm:$0xf]
        %v608 = vld [vmem:[#allocation8 + $0x8] sm:$0xf]
        %v609 = vld [vmem:[#allocation8 + $0xc] sm:$0xf]
        %v610 = vld [vmem:[#allocation8 + $0x10] sm:$0xf]
        %v611 = vld [vmem:[#allocation8 + $0x14] sm:$0xf]
        %v612 = vld [vmem:[#allocation8 + $0x18] sm:$0xf]
        %v613 = vld [vmem:[#allocation8 + $0x1c] sm:$0xf]
        %v614 = vld [vmem:[#allocation8 + $0x20] sm:$0xf]
        %v615 = vld [vmem:[#allocation8 + $0x24] sm:$0xf]
        %v616 = vld [vmem:[#allocation8 + $0x28] sm:$0xf]
        %v617 = vld [vmem:[#allocation8 + $0x2c] sm:$0xf]
        %v618 = vld [vmem:[#allocation8 + $0x30] sm:$0xf]
        %v619 = vld [vmem:[#allocation8 + $0x34] sm:$0xf]
        %v620 = vld [vmem:[#allocation8 + $0x38] sm:$0xf]
        %v621 = vld [vmem:[#allocation8 + $0x3c] sm:$0xf]
        %v622 = vld [vmem:[%s5] sm:$0x1]
        %v624 = vlaneseq
        %v625 = vshrl.u32 %v624, 7
        %v626 = vsub.s32 0, %v625
        %v627 = vrot.slane %v622, %v626
        %v633 = vunpack.c.l.b16 %v602
        %v634 = vunpack.c.l.b16 %v603
        %v635 = vunpack.c.l.b16 %v604
        %v636 = vunpack.c.l.b16 %v605
        %v637 = vpack.c.b16 %v634, %v633
        %v638 = vpack.c.b16 %v636, %v635
        %v657 = vunpack.c.l.b16 %v606
        %v658 = vunpack.c.l.b16 %v607
        %v659 = vunpack.c.l.b16 %v608
        %v660 = vunpack.c.l.b16 %v609
        %v661 = vunpack.c.l.b16 %v610
        %v662 = vunpack.c.l.b16 %v611
        %v663 = vunpack.c.l.b16 %v612
        %v664 = vunpack.c.l.b16 %v613
        %v665 = vunpack.c.l.b16 %v614
        %v666 = vunpack.c.l.b16 %v615
        %v667 = vunpack.c.l.b16 %v616
        %v668 = vunpack.c.l.b16 %v617
        %v669 = vunpack.c.l.b16 %v618
        %v670 = vunpack.c.l.b16 %v619
        %v671 = vunpack.c.l.b16 %v620
        %v672 = vunpack.c.l.b16 %v621
        %v673 = vpack.c.b16 %v658, %v657
        %v674 = vpack.c.b16 %v660, %v659
        %v675 = vpack.c.b16 %v662, %v661
        %v676 = vpack.c.b16 %v664, %v663
        %v677 = vpack.c.b16 %v666, %v665
        %v678 = vpack.c.b16 %v668, %v667
        %v679 = vpack.c.b16 %v670, %v669
        %v680 = vpack.c.b16 %v672, %v671
        %689 = vmatprep.subr.bf16.mxu0 0
        %690 = vmatpush1.bf16.msra.mxu0 %v673
        %691 = vmatprep.subr.bf16.mxu0 0
        %692 = vmatpush1.bf16.msra.mxu0 %v674
        %693 = vmatprep.subr.bf16.mxu0 0
        %694 = vmatpush1.bf16.msra.mxu0 %v675
        %695 = vmatprep.subr.bf16.mxu0 0
        %696 = vmatpush1.bf16.msra.mxu0 %v676
        %697 = vmatprep.subr.bf16.mxu0 0
        %698 = vmatpush1.bf16.msra.mxu0 %v677
        %699 = vmatprep.subr.bf16.mxu0 0
        %700 = vmatpush1.bf16.msra.mxu0 %v678
        %701 = vmatprep.subr.bf16.mxu0 0
        %702 = vmatpush1.bf16.msra.mxu0 %v679
        %703 = vmatprep.subr.bf16.mxu0 0
        %704 = vmatpush1.bf16.msra.mxu0 %v680
        %705 = vmatprep.subr.bf16.mxu0 0
        %706 = vmatpush1.bf16.msra.mxu0 0
        %707 = vmatprep.subr.bf16.mxu0 0
        %708 = vmatpush1.bf16.msra.mxu0 0
        %709 = vmatprep.subr.bf16.mxu0 0
        %710 = vmatpush1.bf16.msra.mxu0 0
        %711 = vmatprep.subr.bf16.mxu0 0
        %712 = vmatpush1.bf16.msra.mxu0 0
        %713 = vmatprep.subr.bf16.mxu0 0
        %714 = vmatpush1.bf16.msra.mxu0 0
        %715 = vmatprep.subr.bf16.mxu0 0
        %716 = vmatpush1.bf16.msra.mxu0 0
        %717 = vmatprep.subr.bf16.mxu0 0
        %718 = vmatpush1.bf16.msra.mxu0 0
        %719 = vmatprep.subr.bf16.mxu0 0
        %720 = vmatpush1.bf16.msra.mxu0 0
        %721 = vmatprep.mubr.bf16.mxu0 0
        %722 = vmatmul.mubr.bf16.gmra.mrb[0].mxu0 %v637
        %v723 = vpop.f32.mrb[0].mxu0
        %v724 = vadd.f32 %v627, %v723
        %v725 = vpop.f32.mrb[0].mxu0
        %v726 = vpop.f32.mrb[0].mxu0
        %v727 = vadd.f32 %v627, %v726
        %v728 = vpop.f32.mrb[0].mxu0
        %729 = vmatprep.mubr.bf16.mxu0 0
        %730 = vmatmul.mubr.bf16.gmra.mrb[0].mxu0 %v638
        %v731 = vpop.f32.mrb[0].mxu0
        %v732 = vadd.f32 %v627, %v731
        %v733 = vpop.f32.mrb[0].mxu0
        %v734 = vpop.f32.mrb[0].mxu0
        %v735 = vadd.f32 %v627, %v734
        %v736 = vpop.f32.mrb[0].mxu0
        %737 = vdwg.mxu0
        %v738 = vpack.c.bf16 %v727, %v724
        %v739 = vpack.c.bf16 %v735, %v732
        %v740 = vld [vmem:[#allocation9] sm:$0xf]
        %v741 = vld [vmem:[#allocation9 + $0x4] sm:$0xf]
        %v742 = vld [vmem:[#allocation9 + $0x8] sm:$0xf]
        %v743 = vld [vmem:[#allocation9 + $0xc] sm:$0xf]
        %v744 = vld [vmem:[#allocation9 + $0x10] sm:$0xf]
        %v745 = vld [vmem:[#allocation9 + $0x14] sm:$0xf]
        %v746 = vld [vmem:[#allocation9 + $0x18] sm:$0xf]
        %v747 = vld [vmem:[#allocation9 + $0x1c] sm:$0xf]
        %v748 = vld [vmem:[#allocation9 + $0x20] sm:$0xf]
        %v749 = vld [vmem:[#allocation9 + $0x24] sm:$0xf]
        %v750 = vld [vmem:[#allocation9 + $0x28] sm:$0xf]
        %v751 = vld [vmem:[#allocation9 + $0x2c] sm:$0xf]
        %v752 = vld [vmem:[#allocation9 + $0x30] sm:$0xf]
        %v753 = vld [vmem:[#allocation9 + $0x34] sm:$0xf]
        %v754 = vld [vmem:[#allocation9 + $0x38] sm:$0xf]
        %v755 = vld [vmem:[#allocation9 + $0x3c] sm:$0xf]
        %v772 = vunpack.c.l.b16 %v740
        %v773 = vunpack.c.l.b16 %v741
        %v774 = vunpack.c.l.b16 %v742
        %v775 = vunpack.c.l.b16 %v743
        %v776 = vunpack.c.l.b16 %v744
        %v777 = vunpack.c.l.b16 %v745
        %v778 = vunpack.c.l.b16 %v746
        %v779 = vunpack.c.l.b16 %v747
        %v780 = vunpack.c.l.b16 %v748
        %v781 = vunpack.c.l.b16 %v749
        %v782 = vunpack.c.l.b16 %v750
        %v783 = vunpack.c.l.b16 %v751
        %v784 = vunpack.c.l.b16 %v752
        %v785 = vunpack.c.l.b16 %v753
        %v786 = vunpack.c.l.b16 %v754
        %v787 = vunpack.c.l.b16 %v755
        %v788 = vpack.c.b16 %v773, %v772
        %v789 = vpack.c.b16 %v775, %v774
        %v790 = vpack.c.b16 %v777, %v776
        %v791 = vpack.c.b16 %v779, %v778
        %v792 = vpack.c.b16 %v781, %v780
        %v793 = vpack.c.b16 %v783, %v782
        %v794 = vpack.c.b16 %v785, %v784
        %v795 = vpack.c.b16 %v787, %v786
        %804 = vmatprep.subr.bf16.mxu0 0
        %805 = vmatpush1.bf16.msra.mxu0 %v788
        %806 = vmatprep.subr.bf16.mxu0 0
        %807 = vmatpush1.bf16.msra.mxu0 %v789
        %808 = vmatprep.subr.bf16.mxu0 0
        %809 = vmatpush1.bf16.msra.mxu0 %v790
        %810 = vmatprep.subr.bf16.mxu0 0
        %811 = vmatpush1.bf16.msra.mxu0 %v791
        %812 = vmatprep.subr.bf16.mxu0 0
        %813 = vmatpush1.bf16.msra.mxu0 %v792
        %814 = vmatprep.subr.bf16.mxu0 0
        %815 = vmatpush1.bf16.msra.mxu0 %v793
        %816 = vmatprep.subr.bf16.mxu0 0
        %817 = vmatpush1.bf16.msra.mxu0 %v794
        %818 = vmatprep.subr.bf16.mxu0 0
        %819 = vmatpush1.bf16.msra.mxu0 %v795
        %820 = vmatprep.subr.bf16.mxu0 0
        %821 = vmatpush1.bf16.msra.mxu0 0
        %822 = vmatprep.subr.bf16.mxu0 0
        %823 = vmatpush1.bf16.msra.mxu0 0
        %824 = vmatprep.subr.bf16.mxu0 0
        %825 = vmatpush1.bf16.msra.mxu0 0
        %826 = vmatprep.subr.bf16.mxu0 0
        %827 = vmatpush1.bf16.msra.mxu0 0
        %828 = vmatprep.subr.bf16.mxu0 0
        %829 = vmatpush1.bf16.msra.mxu0 0
        %830 = vmatprep.subr.bf16.mxu0 0
        %831 = vmatpush1.bf16.msra.mxu0 0
        %832 = vmatprep.subr.bf16.mxu0 0
        %833 = vmatpush1.bf16.msra.mxu0 0
        %834 = vmatprep.subr.bf16.mxu0 0
        %835 = vmatpush1.bf16.msra.mxu0 0
        %836 = vmatprep.mubr.bf16.mxu0 0
        %837 = vmatmul.mubr.bf16.gmra.mrb[0].mxu0 %v738
        %v838 = vpop.f32.mrb[0].mxu0
        %v839 = vadd.f32 0.0, %v838
        %v840 = vpop.f32.mrb[0].mxu0
        %v841 = vpop.f32.mrb[0].mxu0
        %v842 = vadd.f32 0.0, %v841
        %v843 = vpop.f32.mrb[0].mxu0
        %844 = vmatprep.mubr.bf16.mxu0 0
        %845 = vmatmul.mubr.bf16.gmra.mrb[0].mxu0 %v739
        %v846 = vpop.f32.mrb[0].mxu0
        %v847 = vadd.f32 0.0, %v846
        %v848 = vpop.f32.mrb[0].mxu0
        %v849 = vpop.f32.mrb[0].mxu0
        %v850 = vadd.f32 0.0, %v849
        %v851 = vpop.f32.mrb[0].mxu0
        %852 = vdwg.mxu0
        %v853 = vld [vmem:[%s517] sm:$0xf]
        %v854 = vld [vmem:[%s517 + $0x4] sm:$0xf]
        %v855 = vld [vmem:[%s517 + $0x8] sm:$0xf]
        %v856 = vld [vmem:[%s517 + $0xc] sm:$0xf]
        %v857 = vpack.c.bf16 %v842, %v839
        %v858 = vpack.c.bf16 %v850, %v847
        %v861 = vunpack.c.l.b16 %v853
        %v862 = vunpack.c.l.b16 %v854
        %v863 = vpack.c.b16 %v862, %v861
        %vm864 = vcmask 130048
        %v866 = vsel %vm864, %v863, 0
        %868 = vmatprep.subr.bf16.mxu0 0
        %869 = vmatpush1.bf16.msra.mxu0 %v857
        %870 = vmatprep.subr.bf16.mxu0 0
        %871 = vmatpush1.bf16.msra.mxu0 0
        %872 = vmatprep.subr.bf16.mxu0 0
        %873 = vmatpush1.bf16.msra.mxu0 0
        %874 = vmatprep.subr.bf16.mxu0 0
        %875 = vmatpush1.bf16.msra.mxu0 0
        %876 = vmatprep.subr.bf16.mxu0 0
        %877 = vmatpush1.bf16.msra.mxu0 0
        %878 = vmatprep.subr.bf16.mxu0 0
        %879 = vmatpush1.bf16.msra.mxu0 0
        %880 = vmatprep.subr.bf16.mxu0 0
        %881 = vmatpush1.bf16.msra.mxu0 0
        %882 = vmatprep.subr.bf16.mxu0 0
        %883 = vmatpush1.bf16.msra.mxu0 0
        %884 = vmatprep.subr.bf16.mxu0 0
        %885 = vmatpush1.bf16.msra.mxu0 0
        %886 = vmatprep.subr.bf16.mxu0 0
        %887 = vmatpush1.bf16.msra.mxu0 0
        %888 = vmatprep.subr.bf16.mxu0 0
        %889 = vmatpush1.bf16.msra.mxu0 0
        %890 = vmatprep.subr.bf16.mxu0 0
        %891 = vmatpush1.bf16.msra.mxu0 0
        %892 = vmatprep.subr.bf16.mxu0 0
        %893 = vmatpush1.bf16.msra.mxu0 0
        %894 = vmatprep.subr.bf16.mxu0 0
        %895 = vmatpush1.bf16.msra.mxu0 0
        %896 = vmatprep.subr.bf16.mxu0 0
        %897 = vmatpush1.bf16.msra.mxu0 0
        %898 = vmatprep.subr.bf16.mxu0 0
        %899 = vmatpush1.bf16.msra.mxu0 0
        %900 = vmatprep.mubr.bf16.mxu0 0
        %901 = vmatmul.mubr.bf16.gmra.mrb[0].mxu0 %v866
        %v902 = vpop.f32.mrb[0].mxu0
        %v903 = vadd.f32 0.0, %v902
        %v904 = vpop.f32.mrb[0].mxu0
        %v905 = vpop.f32.mrb[0].mxu0
        %v906 = vadd.f32 0.0, %v905
        %v907 = vpop.f32.mrb[0].mxu0
        %908 = vdwg.mxu0
        %v911 = vunpack.c.l.b16 %v855
        %v912 = vunpack.c.l.b16 %v856
        %v913 = vpack.c.b16 %v912, %v911
        %v915 = vsel %vm864, %v913, 0
        %917 = vmatprep.subr.bf16.mxu0 0
        %918 = vmatpush1.bf16.msra.mxu0 %v858
        %919 = vmatprep.subr.bf16.mxu0 0
        %920 = vmatpush1.bf16.msra.mxu0 0
        %921 = vmatprep.subr.bf16.mxu0 0
        %922 = vmatpush1.bf16.msra.mxu0 0
        %923 = vmatprep.subr.bf16.mxu0 0
        %924 = vmatpush1.bf16.msra.mxu0 0
        %925 = vmatprep.subr.bf16.mxu0 0
        %926 = vmatpush1.bf16.msra.mxu0 0
        %927 = vmatprep.subr.bf16.mxu0 0
        %928 = vmatpush1.bf16.msra.mxu0 0
        %929 = vmatprep.subr.bf16.mxu0 0
        %930 = vmatpush1.bf16.msra.mxu0 0
        %931 = vmatprep.subr.bf16.mxu0 0
        %932 = vmatpush1.bf16.msra.mxu0 0
        %933 = vmatprep.subr.bf16.mxu0 0
        %934 = vmatpush1.bf16.msra.mxu0 0
        %935 = vmatprep.subr.bf16.mxu0 0
        %936 = vmatpush1.bf16.msra.mxu0 0
        %937 = vmatprep.subr.bf16.mxu0 0
        %938 = vmatpush1.bf16.msra.mxu0 0
        %939 = vmatprep.subr.bf16.mxu0 0
        %940 = vmatpush1.bf16.msra.mxu0 0
        %941 = vmatprep.subr.bf16.mxu0 0
        %942 = vmatpush1.bf16.msra.mxu0 0
        %943 = vmatprep.subr.bf16.mxu0 0
        %944 = vmatpush1.bf16.msra.mxu0 0
        %945 = vmatprep.subr.bf16.mxu0 0
        %946 = vmatpush1.bf16.msra.mxu0 0
        %947 = vmatprep.subr.bf16.mxu0 0
        %948 = vmatpush1.bf16.msra.mxu0 0
        %949 = vmatprep.mubr.bf16.mxu0 0
        %950 = vmatmul.mubr.bf16.gmra.mrb[0].mxu0 %v915
        %v951 = vpop.f32.mrb[0].mxu0
        %v952 = vadd.f32 0.0, %v951
        %v953 = vpop.f32.mrb[0].mxu0
        %v954 = vpop.f32.mrb[0].mxu0
        %v955 = vadd.f32 0.0, %v954
        %v956 = vpop.f32.mrb[0].mxu0
        %957 = vdwg.mxu0
        %v958 = vld [vmem:[%s7] sm:$0x1]
        %v960 = vlaneseq
        %v961 = vshrl.u32 %v960, 7
        %v962 = vsub.s32 0, %v961
        %v963 = vrot.slane %v958, %v962
        %v965 = vadd.f32 %v903, %v963
        %v966 = vadd.f32 %v906, %v963
        %v967 = vadd.f32 %v952, %v963
        %v968 = vadd.f32 %v955, %v963
        %v969 = vmax.f32 %v965, 0.0
        %v970 = vmax.f32 %v966, 0.0
        %v971 = vmax.f32 %v967, 0.0
        %v972 = vmax.f32 %v968, 0.0
        %v973 = vpack.c.bf16 %v970, %v969
        %v974 = vpack.c.bf16 %v972, %v971
        %s975 = scalar_lea.vmem [#allocation9], 64
        %v976 = vld [vmem:[%s975] sm:$0xf]
        %v977 = vld [vmem:[%s975 + $0x4] sm:$0xf]
        %v978 = vld [vmem:[%s975 + $0x8] sm:$0xf]
        %v979 = vld [vmem:[%s975 + $0xc] sm:$0xf]
        %v980 = vld [vmem:[%s975 + $0x10] sm:$0xf]
        %v981 = vld [vmem:[%s975 + $0x14] sm:$0xf]
        %v982 = vld [vmem:[%s975 + $0x18] sm:$0xf]
        %v983 = vld [vmem:[%s975 + $0x1c] sm:$0xf]
        %v984 = vld [vmem:[%s975 + $0x20] sm:$0xf]
        %v985 = vld [vmem:[%s975 + $0x24] sm:$0xf]
        %v986 = vld [vmem:[%s975 + $0x28] sm:$0xf]
        %v987 = vld [vmem:[%s975 + $0x2c] sm:$0xf]
        %v988 = vld [vmem:[%s975 + $0x30] sm:$0xf]
        %v989 = vld [vmem:[%s975 + $0x34] sm:$0xf]
        %v990 = vld [vmem:[%s975 + $0x38] sm:$0xf]
        %v991 = vld [vmem:[%s975 + $0x3c] sm:$0xf]
        %v1008 = vunpack.c.l.b16 %v976
        %v1009 = vunpack.c.l.b16 %v977
        %v1010 = vunpack.c.l.b16 %v978
        %v1011 = vunpack.c.l.b16 %v979
        %v1012 = vunpack.c.l.b16 %v980
        %v1013 = vunpack.c.l.b16 %v981
        %v1014 = vunpack.c.l.b16 %v982
        %v1015 = vunpack.c.l.b16 %v983
        %v1016 = vunpack.c.l.b16 %v984
        %v1017 = vunpack.c.l.b16 %v985
        %v1018 = vunpack.c.l.b16 %v986
        %v1019 = vunpack.c.l.b16 %v987
        %v1020 = vunpack.c.l.b16 %v988
        %v1021 = vunpack.c.l.b16 %v989
        %v1022 = vunpack.c.l.b16 %v990
        %v1023 = vunpack.c.l.b16 %v991
        %v1024 = vpack.c.b16 %v1009, %v1008
        %v1025 = vpack.c.b16 %v1011, %v1010
        %v1026 = vpack.c.b16 %v1013, %v1012
        %v1027 = vpack.c.b16 %v1015, %v1014
        %v1028 = vpack.c.b16 %v1017, %v1016
        %v1029 = vpack.c.b16 %v1019, %v1018
        %v1030 = vpack.c.b16 %v1021, %v1020
        %v1031 = vpack.c.b16 %v1023, %v1022
        %1040 = vmatprep.subr.bf16.mxu0 0
        %1041 = vmatpush1.bf16.msra.mxu0 %v1024
        %1042 = vmatprep.subr.bf16.mxu0 0
        %1043 = vmatpush1.bf16.msra.mxu0 %v1025
        %1044 = vmatprep.subr.bf16.mxu0 0
        %1045 = vmatpush1.bf16.msra.mxu0 %v1026
        %1046 = vmatprep.subr.bf16.mxu0 0
        %1047 = vmatpush1.bf16.msra.mxu0 %v1027
        %1048 = vmatprep.subr.bf16.mxu0 0
        %1049 = vmatpush1.bf16.msra.mxu0 %v1028
        %1050 = vmatprep.subr.bf16.mxu0 0
        %1051 = vmatpush1.bf16.msra.mxu0 %v1029
        %1052 = vmatprep.subr.bf16.mxu0 0
        %1053 = vmatpush1.bf16.msra.mxu0 %v1030
        %1054 = vmatprep.subr.bf16.mxu0 0
        %1055 = vmatpush1.bf16.msra.mxu0 %v1031
        %1056 = vmatprep.subr.bf16.mxu0 0
        %1057 = vmatpush1.bf16.msra.mxu0 0
        %1058 = vmatprep.subr.bf16.mxu0 0
        %1059 = vmatpush1.bf16.msra.mxu0 0
        %1060 = vmatprep.subr.bf16.mxu0 0
        %1061 = vmatpush1.bf16.msra.mxu0 0
        %1062 = vmatprep.subr.bf16.mxu0 0
        %1063 = vmatpush1.bf16.msra.mxu0 0
        %1064 = vmatprep.subr.bf16.mxu0 0
        %1065 = vmatpush1.bf16.msra.mxu0 0
        %1066 = vmatprep.subr.bf16.mxu0 0
        %1067 = vmatpush1.bf16.msra.mxu0 0
        %1068 = vmatprep.subr.bf16.mxu0 0
        %1069 = vmatpush1.bf16.msra.mxu0 0
        %1070 = vmatprep.subr.bf16.mxu0 0
        %1071 = vmatpush1.bf16.msra.mxu0 0
        %1072 = vmatprep.mubr.bf16.mxu0 0
        %1073 = vmatmul.mubr.bf16.gmra.mrb[0].mxu0 %v973
        %v1074 = vpop.f32.mrb[0].mxu0
        %v1075 = vadd.f32 0.0, %v1074
        %v1076 = vpop.f32.mrb[0].mxu0
        %v1077 = vpop.f32.mrb[0].mxu0
        %v1078 = vadd.f32 0.0, %v1077
        %v1079 = vpop.f32.mrb[0].mxu0
        %1080 = vmatprep.mubr.bf16.mxu0 0
        %1081 = vmatmul.mubr.bf16.gmra.mrb[0].mxu0 %v974
        %v1082 = vpop.f32.mrb[0].mxu0
        %v1083 = vadd.f32 0.0, %v1082
        %v1084 = vpop.f32.mrb[0].mxu0
        %v1085 = vpop.f32.mrb[0].mxu0
        %v1086 = vadd.f32 0.0, %v1085
        %v1087 = vpop.f32.mrb[0].mxu0
        %1088 = vdwg.mxu0
        %v1089 = vpack.c.bf16 %v1078, %v1075
        %v1090 = vpack.c.bf16 %v1086, %v1083
        %1091 = vmatprep.subr.bf16.mxu0 0
        %1092 = vmatpush1.bf16.msra.mxu0 %v1089
        %1093 = vmatprep.subr.bf16.mxu0 0
        %1094 = vmatpush1.bf16.msra.mxu0 0
        %1095 = vmatprep.subr.bf16.mxu0 0
        %1096 = vmatpush1.bf16.msra.mxu0 0
        %1097 = vmatprep.subr.bf16.mxu0 0
        %1098 = vmatpush1.bf16.msra.mxu0 0
        %1099 = vmatprep.subr.bf16.mxu0 0
        %1100 = vmatpush1.bf16.msra.mxu0 0
        %1101 = vmatprep.subr.bf16.mxu0 0
        %1102 = vmatpush1.bf16.msra.mxu0 0
        %1103 = vmatprep.subr.bf16.mxu0 0
        %1104 = vmatpush1.bf16.msra.mxu0 0
        %1105 = vmatprep.subr.bf16.mxu0 0
        %1106 = vmatpush1.bf16.msra.mxu0 0
        %1107 = vmatprep.subr.bf16.mxu0 0
        %1108 = vmatpush1.bf16.msra.mxu0 0
        %1109 = vmatprep.subr.bf16.mxu0 0
        %1110 = vmatpush1.bf16.msra.mxu0 0
        %1111 = vmatprep.subr.bf16.mxu0 0
        %1112 = vmatpush1.bf16.msra.mxu0 0
        %1113 = vmatprep.subr.bf16.mxu0 0
        %1114 = vmatpush1.bf16.msra.mxu0 0
        %1115 = vmatprep.subr.bf16.mxu0 0
        %1116 = vmatpush1.bf16.msra.mxu0 0
        %1117 = vmatprep.subr.bf16.mxu0 0
        %1118 = vmatpush1.bf16.msra.mxu0 0
        %1119 = vmatprep.subr.bf16.mxu0 0
        %1120 = vmatpush1.bf16.msra.mxu0 0
        %1121 = vmatprep.subr.bf16.mxu0 0
        %1122 = vmatpush1.bf16.msra.mxu0 0
        %1123 = vmatprep.mubr.bf16.mxu0 0
        %1124 = vmatmul.mubr.bf16.gmra.mrb[0].mxu0 %v866
        %v1125 = vpop.f32.mrb[0].mxu0
        %v1126 = vadd.f32 0.0, %v1125
        %v1127 = vpop.f32.mrb[0].mxu0
        %v1128 = vpop.f32.mrb[0].mxu0
        %v1129 = vadd.f32 0.0, %v1128
        %v1130 = vpop.f32.mrb[0].mxu0
        %1131 = vdwg.mxu0
        %1132 = vmatprep.subr.bf16.mxu0 0
        %1133 = vmatpush1.bf16.msra.mxu0 %v1090
        %1134 = vmatprep.subr.bf16.mxu0 0
        %1135 = vmatpush1.bf16.msra.mxu0 0
        %1136 = vmatprep.subr.bf16.mxu0 0
        %1137 = vmatpush1.bf16.msra.mxu0 0
        %1138 = vmatprep.subr.bf16.mxu0 0
        %1139 = vmatpush1.bf16.msra.mxu0 0
        %1140 = vmatprep.subr.bf16.mxu0 0
        %1141 = vmatpush1.bf16.msra.mxu0 0
        %1142 = vmatprep.subr.bf16.mxu0 0
        %1143 = vmatpush1.bf16.msra.mxu0 0
        %1144 = vmatprep.subr.bf16.mxu0 0
        %1145 = vmatpush1.bf16.msra.mxu0 0
        %1146 = vmatprep.subr.bf16.mxu0 0
        %1147 = vmatpush1.bf16.msra.mxu0 0
        %1148 = vmatprep.subr.bf16.mxu0 0
        %1149 = vmatpush1.bf16.msra.mxu0 0
        %1150 = vmatprep.subr.bf16.mxu0 0
        %1151 = vmatpush1.bf16.msra.mxu0 0
        %1152 = vmatprep.subr.bf16.mxu0 0
        %1153 = vmatpush1.bf16.msra.mxu0 0
        %1154 = vmatprep.subr.bf16.mxu0 0
        %1155 = vmatpush1.bf16.msra.mxu0 0
        %1156 = vmatprep.subr.bf16.mxu0 0
        %1157 = vmatpush1.bf16.msra.mxu0 0
        %1158 = vmatprep.subr.bf16.mxu0 0
        %1159 = vmatpush1.bf16.msra.mxu0 0
        %1160 = vmatprep.subr.bf16.mxu0 0
        %1161 = vmatpush1.bf16.msra.mxu0 0
        %1162 = vmatprep.subr.bf16.mxu0 0
        %1163 = vmatpush1.bf16.msra.mxu0 0
        %1164 = vmatprep.mubr.bf16.mxu0 0
        %1165 = vmatmul.mubr.bf16.gmra.mrb[0].mxu0 %v915
        %v1166 = vpop.f32.mrb[0].mxu0
        %v1167 = vadd.f32 0.0, %v1166
        %v1168 = vpop.f32.mrb[0].mxu0
        %v1169 = vpop.f32.mrb[0].mxu0
        %v1170 = vadd.f32 0.0, %v1169
        %v1171 = vpop.f32.mrb[0].mxu0
        %1172 = vdwg.mxu0
        %s1173 = scalar_lea.vmem %s7, 1
        %v1174 = vld [vmem:[%s1173] sm:$0x1]
        %v1176 = vlaneseq
        %v1177 = vshrl.u32 %v1176, 7
        %v1178 = vsub.s32 0, %v1177
        %v1179 = vrot.slane %v1174, %v1178
        %v1181 = vadd.f32 %v1126, %v1179
        %v1182 = vadd.f32 %v1129, %v1179
        %v1183 = vadd.f32 %v1167, %v1179
        %v1184 = vadd.f32 %v1170, %v1179
        %v1185 = vmax.f32 %v1181, 0.0
        %v1186 = vmax.f32 %v1182, 0.0
        %v1187 = vmax.f32 %v1183, 0.0
        %v1188 = vmax.f32 %v1184, 0.0
        %v1189 = vpack.c.bf16 %v1186, %v1185
        %v1190 = vpack.c.bf16 %v1188, %v1187
        %s1191 = scalar_lea.vmem [#allocation9], 128
        %v1192 = vld [vmem:[%s1191] sm:$0xf]
        %v1193 = vld [vmem:[%s1191 + $0x4] sm:$0xf]
        %v1194 = vld [vmem:[%s1191 + $0x8] sm:$0xf]
        %v1195 = vld [vmem:[%s1191 + $0xc] sm:$0xf]
        %v1196 = vld [vmem:[%s1191 + $0x10] sm:$0xf]
        %v1197 = vld [vmem:[%s1191 + $0x14] sm:$0xf]
        %v1198 = vld [vmem:[%s1191 + $0x18] sm:$0xf]
        %v1199 = vld [vmem:[%s1191 + $0x1c] sm:$0xf]
        %v1200 = vld [vmem:[%s1191 + $0x20] sm:$0xf]
        %v1201 = vld [vmem:[%s1191 + $0x24] sm:$0xf]
        %v1202 = vld [vmem:[%s1191 + $0x28] sm:$0xf]
        %v1203 = vld [vmem:[%s1191 + $0x2c] sm:$0xf]
        %v1204 = vld [vmem:[%s1191 + $0x30] sm:$0xf]
        %v1205 = vld [vmem:[%s1191 + $0x34] sm:$0xf]
        %v1206 = vld [vmem:[%s1191 + $0x38] sm:$0xf]
        %v1207 = vld [vmem:[%s1191 + $0x3c] sm:$0xf]
        %v1224 = vunpack.c.l.b16 %v1192
        %v1225 = vunpack.c.l.b16 %v1193
        %v1226 = vunpack.c.l.b16 %v1194
        %v1227 = vunpack.c.l.b16 %v1195
        %v1228 = vunpack.c.l.b16 %v1196
        %v1229 = vunpack.c.l.b16 %v1197
        %v1230 = vunpack.c.l.b16 %v1198
        %v1231 = vunpack.c.l.b16 %v1199
        %v1232 = vunpack.c.l.b16 %v1200
        %v1233 = vunpack.c.l.b16 %v1201
        %v1234 = vunpack.c.l.b16 %v1202
        %v1235 = vunpack.c.l.b16 %v1203
        %v1236 = vunpack.c.l.b16 %v1204
        %v1237 = vunpack.c.l.b16 %v1205
        %v1238 = vunpack.c.l.b16 %v1206
        %v1239 = vunpack.c.l.b16 %v1207
        %v1240 = vpack.c.b16 %v1225, %v1224
        %v1241 = vpack.c.b16 %v1227, %v1226
        %v1242 = vpack.c.b16 %v1229, %v1228
        %v1243 = vpack.c.b16 %v1231, %v1230
        %v1244 = vpack.c.b16 %v1233, %v1232
        %v1245 = vpack.c.b16 %v1235, %v1234
        %v1246 = vpack.c.b16 %v1237, %v1236
        %v1247 = vpack.c.b16 %v1239, %v1238
        %1256 = vmatprep.subr.bf16.mxu0 0
        %1257 = vmatpush1.bf16.msra.mxu0 %v1240
        %1258 = vmatprep.subr.bf16.mxu0 0
        %1259 = vmatpush1.bf16.msra.mxu0 %v1241
        %1260 = vmatprep.subr.bf16.mxu0 0
        %1261 = vmatpush1.bf16.msra.mxu0 %v1242
        %1262 = vmatprep.subr.bf16.mxu0 0
        %1263 = vmatpush1.bf16.msra.mxu0 %v1243
        %1264 = vmatprep.subr.bf16.mxu0 0
        %1265 = vmatpush1.bf16.msra.mxu0 %v1244
        %1266 = vmatprep.subr.bf16.mxu0 0
        %1267 = vmatpush1.bf16.msra.mxu0 %v1245
        %1268 = vmatprep.subr.bf16.mxu0 0
        %1269 = vmatpush1.bf16.msra.mxu0 %v1246
        %1270 = vmatprep.subr.bf16.mxu0 0
        %1271 = vmatpush1.bf16.msra.mxu0 %v1247
        %1272 = vmatprep.subr.bf16.mxu0 0
        %1273 = vmatpush1.bf16.msra.mxu0 0
        %1274 = vmatprep.subr.bf16.mxu0 0
        %1275 = vmatpush1.bf16.msra.mxu0 0
        %1276 = vmatprep.subr.bf16.mxu0 0
        %1277 = vmatpush1.bf16.msra.mxu0 0
        %1278 = vmatprep.subr.bf16.mxu0 0
        %1279 = vmatpush1.bf16.msra.mxu0 0
        %1280 = vmatprep.subr.bf16.mxu0 0
        %1281 = vmatpush1.bf16.msra.mxu0 0
        %1282 = vmatprep.subr.bf16.mxu0 0
        %1283 = vmatpush1.bf16.msra.mxu0 0
        %1284 = vmatprep.subr.bf16.mxu0 0
        %1285 = vmatpush1.bf16.msra.mxu0 0
        %1286 = vmatprep.subr.bf16.mxu0 0
        %1287 = vmatpush1.bf16.msra.mxu0 0
        %1288 = vmatprep.mubr.bf16.mxu0 0
        %1289 = vmatmul.mubr.bf16.gmra.mrb[0].mxu0 %v1189
        %v1290 = vpop.f32.mrb[0].mxu0
        %v1291 = vadd.f32 0.0, %v1290
        %v1292 = vpop.f32.mrb[0].mxu0
        %v1293 = vpop.f32.mrb[0].mxu0
        %v1294 = vadd.f32 0.0, %v1293
        %v1295 = vpop.f32.mrb[0].mxu0
        %1296 = vmatprep.mubr.bf16.mxu0 0
        %1297 = vmatmul.mubr.bf16.gmra.mrb[0].mxu0 %v1190
        %v1298 = vpop.f32.mrb[0].mxu0
        %v1299 = vadd.f32 0.0, %v1298
        %v1300 = vpop.f32.mrb[0].mxu0
        %v1301 = vpop.f32.mrb[0].mxu0
        %v1302 = vadd.f32 0.0, %v1301
        %v1303 = vpop.f32.mrb[0].mxu0
        %1304 = vdwg.mxu0
        %v1305 = vpack.c.bf16 %v1294, %v1291
        %v1306 = vpack.c.bf16 %v1302, %v1299
        %1307 = vmatprep.subr.bf16.mxu0 0
        %1308 = vmatpush1.bf16.msra.mxu0 %v1305
        %1309 = vmatprep.subr.bf16.mxu0 0
        %1310 = vmatpush1.bf16.msra.mxu0 0
        %1311 = vmatprep.subr.bf16.mxu0 0
        %1312 = vmatpush1.bf16.msra.mxu0 0
        %1313 = vmatprep.subr.bf16.mxu0 0
        %1314 = vmatpush1.bf16.msra.mxu0 0
        %1315 = vmatprep.subr.bf16.mxu0 0
        %1316 = vmatpush1.bf16.msra.mxu0 0
        %1317 = vmatprep.subr.bf16.mxu0 0
        %1318 = vmatpush1.bf16.msra.mxu0 0
        %1319 = vmatprep.subr.bf16.mxu0 0
        %1320 = vmatpush1.bf16.msra.mxu0 0
        %1321 = vmatprep.subr.bf16.mxu0 0
        %1322 = vmatpush1.bf16.msra.mxu0 0
        %1323 = vmatprep.subr.bf16.mxu0 0
        %1324 = vmatpush1.bf16.msra.mxu0 0
        %1325 = vmatprep.subr.bf16.mxu0 0
        %1326 = vmatpush1.bf16.msra.mxu0 0
        %1327 = vmatprep.subr.bf16.mxu0 0
        %1328 = vmatpush1.bf16.msra.mxu0 0
        %1329 = vmatprep.subr.bf16.mxu0 0
        %1330 = vmatpush1.bf16.msra.mxu0 0
        %1331 = vmatprep.subr.bf16.mxu0 0
        %1332 = vmatpush1.bf16.msra.mxu0 0
        %1333 = vmatprep.subr.bf16.mxu0 0
        %1334 = vmatpush1.bf16.msra.mxu0 0
        %1335 = vmatprep.subr.bf16.mxu0 0
        %1336 = vmatpush1.bf16.msra.mxu0 0
        %1337 = vmatprep.subr.bf16.mxu0 0
        %1338 = vmatpush1.bf16.msra.mxu0 0
        %1339 = vmatprep.mubr.bf16.mxu0 0
        %1340 = vmatmul.mubr.bf16.gmra.mrb[0].mxu0 %v866
        %v1341 = vpop.f32.mrb[0].mxu0
        %v1342 = vadd.f32 0.0, %v1341
        %v1343 = vpop.f32.mrb[0].mxu0
        %v1344 = vpop.f32.mrb[0].mxu0
        %v1345 = vadd.f32 0.0, %v1344
        %v1346 = vpop.f32.mrb[0].mxu0
        %1347 = vdwg.mxu0
        %1348 = vmatprep.subr.bf16.mxu0 0
        %1349 = vmatpush1.bf16.msra.mxu0 %v1306
        %1350 = vmatprep.subr.bf16.mxu0 0
        %1351 = vmatpush1.bf16.msra.mxu0 0
        %1352 = vmatprep.subr.bf16.mxu0 0
        %1353 = vmatpush1.bf16.msra.mxu0 0
        %1354 = vmatprep.subr.bf16.mxu0 0
        %1355 = vmatpush1.bf16.msra.mxu0 0
        %1356 = vmatprep.subr.bf16.mxu0 0
        %1357 = vmatpush1.bf16.msra.mxu0 0
        %1358 = vmatprep.subr.bf16.mxu0 0
        %1359 = vmatpush1.bf16.msra.mxu0 0
        %1360 = vmatprep.subr.bf16.mxu0 0
        %1361 = vmatpush1.bf16.msra.mxu0 0
        %1362 = vmatprep.subr.bf16.mxu0 0
        %1363 = vmatpush1.bf16.msra.mxu0 0
        %1364 = vmatprep.subr.bf16.mxu0 0
        %1365 = vmatpush1.bf16.msra.mxu0 0
        %1366 = vmatprep.subr.bf16.mxu0 0
        %1367 = vmatpush1.bf16.msra.mxu0 0
        %1368 = vmatprep.subr.bf16.mxu0 0
        %1369 = vmatpush1.bf16.msra.mxu0 0
        %1370 = vmatprep.subr.bf16.mxu0 0
        %1371 = vmatpush1.bf16.msra.mxu0 0
        %1372 = vmatprep.subr.bf16.mxu0 0
        %1373 = vmatpush1.bf16.msra.mxu0 0
        %1374 = vmatprep.subr.bf16.mxu0 0
        %1375 = vmatpush1.bf16.msra.mxu0 0
        %1376 = vmatprep.subr.bf16.mxu0 0
        %1377 = vmatpush1.bf16.msra.mxu0 0
        %1378 = vmatprep.subr.bf16.mxu0 0
        %1379 = vmatpush1.bf16.msra.mxu0 0
        %1380 = vmatprep.mubr.bf16.mxu0 0
        %1381 = vmatmul.mubr.bf16.gmra.mrb[0].mxu0 %v915
        %v1382 = vpop.f32.mrb[0].mxu0
        %v1383 = vadd.f32 0.0, %v1382
        %v1384 = vpop.f32.mrb[0].mxu0
        %v1385 = vpop.f32.mrb[0].mxu0
        %v1386 = vadd.f32 0.0, %v1385
        %v1387 = vpop.f32.mrb[0].mxu0
        %1388 = vdwg.mxu0
        %s1389 = scalar_lea.vmem %s7, 2
        %v1390 = vld [vmem:[%s1389] sm:$0x1]
        %v1392 = vlaneseq
        %v1393 = vshrl.u32 %v1392, 7
        %v1394 = vsub.s32 0, %v1393
        %v1395 = vrot.slane %v1390, %v1394
        %v1397 = vadd.f32 %v1342, %v1395
        %v1398 = vadd.f32 %v1345, %v1395
        %v1399 = vadd.f32 %v1383, %v1395
        %v1400 = vadd.f32 %v1386, %v1395
        %v1401 = vmax.f32 %v1397, 0.0
        %v1402 = vmax.f32 %v1398, 0.0
        %v1403 = vmax.f32 %v1399, 0.0
        %v1404 = vmax.f32 %v1400, 0.0
        %v1405 = vpack.c.bf16 %v1402, %v1401
        %v1406 = vpack.c.bf16 %v1404, %v1403
        %v1407 = vld [vmem:[#allocation11] sm:$0xf]
        %v1408 = vld [vmem:[#allocation11 + $0x4] sm:$0xf]
        %v1409 = vld [vmem:[#allocation11 + $0x8] sm:$0xf]
        %v1410 = vld [vmem:[#allocation11 + $0xc] sm:$0xf]
        %v1411 = vld [vmem:[#allocation11 + $0x10] sm:$0xf]
        %v1412 = vld [vmem:[#allocation11 + $0x14] sm:$0xf]
        %v1413 = vld [vmem:[#allocation11 + $0x18] sm:$0xf]
        %v1414 = vld [vmem:[#allocation11 + $0x1c] sm:$0xf]
        %v1415 = vld [vmem:[#allocation11 + $0x20] sm:$0xf]
        %v1416 = vld [vmem:[#allocation11 + $0x24] sm:$0xf]
        %v1417 = vld [vmem:[#allocation11 + $0x28] sm:$0xf]
        %v1418 = vld [vmem:[#allocation11 + $0x2c] sm:$0xf]
        %v1419 = vld [vmem:[#allocation11 + $0x30] sm:$0xf]
        %v1420 = vld [vmem:[#allocation11 + $0x34] sm:$0xf]
        %v1421 = vld [vmem:[#allocation11 + $0x38] sm:$0xf]
        %v1422 = vld [vmem:[#allocation11 + $0x3c] sm:$0xf]
        %v1439 = vunpack.c.l.b16 %v1407
        %v1440 = vunpack.c.l.b16 %v1408
        %v1441 = vunpack.c.l.b16 %v1409
        %v1442 = vunpack.c.l.b16 %v1410
        %v1443 = vunpack.c.l.b16 %v1411
        %v1444 = vunpack.c.l.b16 %v1412
        %v1445 = vunpack.c.l.b16 %v1413
        %v1446 = vunpack.c.l.b16 %v1414
        %v1447 = vunpack.c.l.b16 %v1415
        %v1448 = vunpack.c.l.b16 %v1416
        %v1449 = vunpack.c.l.b16 %v1417
        %v1450 = vunpack.c.l.b16 %v1418
        %v1451 = vunpack.c.l.b16 %v1419
        %v1452 = vunpack.c.l.b16 %v1420
        %v1453 = vunpack.c.l.b16 %v1421
        %v1454 = vunpack.c.l.b16 %v1422
        %v1455 = vpack.c.b16 %v1440, %v1439
        %v1456 = vpack.c.b16 %v1442, %v1441
        %v1457 = vpack.c.b16 %v1444, %v1443
        %v1458 = vpack.c.b16 %v1446, %v1445
        %v1459 = vpack.c.b16 %v1448, %v1447
        %v1460 = vpack.c.b16 %v1450, %v1449
        %v1461 = vpack.c.b16 %v1452, %v1451
        %v1462 = vpack.c.b16 %v1454, %v1453
        %1471 = vmatprep.subr.bf16.mxu0 0
        %1472 = vmatpush1.bf16.msra.mxu0 %v1455
        %1473 = vmatprep.subr.bf16.mxu0 0
        %1474 = vmatpush1.bf16.msra.mxu0 %v1456
        %1475 = vmatprep.subr.bf16.mxu0 0
        %1476 = vmatpush1.bf16.msra.mxu0 %v1457
        %1477 = vmatprep.subr.bf16.mxu0 0
        %1478 = vmatpush1.bf16.msra.mxu0 %v1458
        %1479 = vmatprep.subr.bf16.mxu0 0
        %1480 = vmatpush1.bf16.msra.mxu0 %v1459
        %1481 = vmatprep.subr.bf16.mxu0 0
        %1482 = vmatpush1.bf16.msra.mxu0 %v1460
        %1483 = vmatprep.subr.bf16.mxu0 0
        %1484 = vmatpush1.bf16.msra.mxu0 %v1461
        %1485 = vmatprep.subr.bf16.mxu0 0
        %1486 = vmatpush1.bf16.msra.mxu0 %v1462
        %1487 = vmatprep.subr.bf16.mxu0 0
        %1488 = vmatpush1.bf16.msra.mxu0 0
        %1489 = vmatprep.subr.bf16.mxu0 0
        %1490 = vmatpush1.bf16.msra.mxu0 0
        %1491 = vmatprep.subr.bf16.mxu0 0
        %1492 = vmatpush1.bf16.msra.mxu0 0
        %1493 = vmatprep.subr.bf16.mxu0 0
        %1494 = vmatpush1.bf16.msra.mxu0 0
        %1495 = vmatprep.subr.bf16.mxu0 0
        %1496 = vmatpush1.bf16.msra.mxu0 0
        %1497 = vmatprep.subr.bf16.mxu0 0
        %1498 = vmatpush1.bf16.msra.mxu0 0
        %1499 = vmatprep.subr.bf16.mxu0 0
        %1500 = vmatpush1.bf16.msra.mxu0 0
        %1501 = vmatprep.subr.bf16.mxu0 0
        %1502 = vmatpush1.bf16.msra.mxu0 0
        %1503 = vmatprep.mubr.bf16.mxu0 0
        %1504 = vmatmul.mubr.bf16.gmra.mrb[0].mxu0 %v1405
        %v1505 = vpop.f32.mrb[0].mxu0
        %v1506 = vadd.f32 0.0, %v1505
        %v1507 = vpop.f32.mrb[0].mxu0
        %v1508 = vpop.f32.mrb[0].mxu0
        %v1509 = vadd.f32 0.0, %v1508
        %v1510 = vpop.f32.mrb[0].mxu0
        %1511 = vmatprep.mubr.bf16.mxu0 0
        %1512 = vmatmul.mubr.bf16.gmra.mrb[0].mxu0 %v1406
        %v1513 = vpop.f32.mrb[0].mxu0
        %v1514 = vadd.f32 0.0, %v1513
        %v1515 = vpop.f32.mrb[0].mxu0
        %v1516 = vpop.f32.mrb[0].mxu0
        %v1517 = vadd.f32 0.0, %v1516
        %v1518 = vpop.f32.mrb[0].mxu0
        %1519 = vdwg.mxu0
        %v1520 = vpack.c.bf16 %v1509, %v1506
        %v1521 = vpack.c.bf16 %v1517, %v1514
        %v1522 = vld [vmem:[#allocation12] sm:$0xf]
        %v1523 = vld [vmem:[#allocation12 + $0x4] sm:$0xf]
        %v1524 = vld [vmem:[#allocation12 + $0x8] sm:$0xf]
        %v1525 = vld [vmem:[#allocation12 + $0xc] sm:$0xf]
        %v1526 = vld [vmem:[#allocation12 + $0x10] sm:$0xf]
        %v1527 = vld [vmem:[#allocation12 + $0x14] sm:$0xf]
        %v1528 = vld [vmem:[#allocation12 + $0x18] sm:$0xf]
        %v1529 = vld [vmem:[#allocation12 + $0x1c] sm:$0xf]
        %v1530 = vld [vmem:[#allocation12 + $0x20] sm:$0xf]
        %v1531 = vld [vmem:[#allocation12 + $0x24] sm:$0xf]
        %v1532 = vld [vmem:[#allocation12 + $0x28] sm:$0xf]
        %v1533 = vld [vmem:[#allocation12 + $0x2c] sm:$0xf]
        %v1534 = vld [vmem:[#allocation12 + $0x30] sm:$0xf]
        %v1535 = vld [vmem:[#allocation12 + $0x34] sm:$0xf]
        %v1536 = vld [vmem:[#allocation12 + $0x38] sm:$0xf]
        %v1537 = vld [vmem:[#allocation12 + $0x3c] sm:$0xf]
        %v1554 = vunpack.c.l.b16 %v1522
        %v1555 = vunpack.c.l.b16 %v1523
        %v1556 = vunpack.c.l.b16 %v1524
        %v1557 = vunpack.c.l.b16 %v1525
        %v1558 = vunpack.c.l.b16 %v1526
        %v1559 = vunpack.c.l.b16 %v1527
        %v1560 = vunpack.c.l.b16 %v1528
        %v1561 = vunpack.c.l.b16 %v1529
        %v1562 = vunpack.c.l.b16 %v1530
        %v1563 = vunpack.c.l.b16 %v1531
        %v1564 = vunpack.c.l.b16 %v1532
        %v1565 = vunpack.c.l.b16 %v1533
        %v1566 = vunpack.c.l.b16 %v1534
        %v1567 = vunpack.c.l.b16 %v1535
        %v1568 = vunpack.c.l.b16 %v1536
        %v1569 = vunpack.c.l.b16 %v1537
        %v1570 = vpack.c.b16 %v1555, %v1554
        %v1571 = vpack.c.b16 %v1557, %v1556
        %v1572 = vpack.c.b16 %v1559, %v1558
        %v1573 = vpack.c.b16 %v1561, %v1560
        %v1574 = vpack.c.b16 %v1563, %v1562
        %v1575 = vpack.c.b16 %v1565, %v1564
        %v1576 = vpack.c.b16 %v1567, %v1566
        %v1577 = vpack.c.b16 %v1569, %v1568
        %1586 = vmatprep.subr.bf16.mxu0 0
        %1587 = vmatpush1.bf16.msra.mxu0 %v1570
        %1588 = vmatprep.subr.bf16.mxu0 0
        %1589 = vmatpush1.bf16.msra.mxu0 %v1571
        %1590 = vmatprep.subr.bf16.mxu0 0
        %1591 = vmatpush1.bf16.msra.mxu0 %v1572
        %1592 = vmatprep.subr.bf16.mxu0 0
        %1593 = vmatpush1.bf16.msra.mxu0 %v1573
        %1594 = vmatprep.subr.bf16.mxu0 0
        %1595 = vmatpush1.bf16.msra.mxu0 %v1574
        %1596 = vmatprep.subr.bf16.mxu0 0
        %1597 = vmatpush1.bf16.msra.mxu0 %v1575
        %1598 = vmatprep.subr.bf16.mxu0 0
        %1599 = vmatpush1.bf16.msra.mxu0 %v1576
        %1600 = vmatprep.subr.bf16.mxu0 0
        %1601 = vmatpush1.bf16.msra.mxu0 %v1577
        %1602 = vmatprep.subr.bf16.mxu0 0
        %1603 = vmatpush1.bf16.msra.mxu0 0
        %1604 = vmatprep.subr.bf16.mxu0 0
        %1605 = vmatpush1.bf16.msra.mxu0 0
        %1606 = vmatprep.subr.bf16.mxu0 0
        %1607 = vmatpush1.bf16.msra.mxu0 0
        %1608 = vmatprep.subr.bf16.mxu0 0
        %1609 = vmatpush1.bf16.msra.mxu0 0
        %1610 = vmatprep.subr.bf16.mxu0 0
        %1611 = vmatpush1.bf16.msra.mxu0 0
        %1612 = vmatprep.subr.bf16.mxu0 0
        %1613 = vmatpush1.bf16.msra.mxu0 0
        %1614 = vmatprep.subr.bf16.mxu0 0
        %1615 = vmatpush1.bf16.msra.mxu0 0
        %1616 = vmatprep.subr.bf16.mxu0 0
        %1617 = vmatpush1.bf16.msra.mxu0 0
        %1618 = vmatprep.mubr.bf16.mxu0 0
        %1619 = vmatmul.mubr.bf16.gmra.mrb[0].mxu0 %v1405
        %v1620 = vpop.f32.mrb[0].mxu0
        %v1621 = vadd.f32 0.0, %v1620
        %v1622 = vpop.f32.mrb[0].mxu0
        %v1623 = vpop.f32.mrb[0].mxu0
        %v1624 = vadd.f32 0.0, %v1623
        %v1625 = vpop.f32.mrb[0].mxu0
        %1626 = vmatprep.mubr.bf16.mxu0 0
        %1627 = vmatmul.mubr.bf16.gmra.mrb[0].mxu0 %v1406
        %v1628 = vpop.f32.mrb[0].mxu0
        %v1629 = vadd.f32 0.0, %v1628
        %v1630 = vpop.f32.mrb[0].mxu0
        %v1631 = vpop.f32.mrb[0].mxu0
        %v1632 = vadd.f32 0.0, %v1631
        %v1633 = vpop.f32.mrb[0].mxu0
        %1634 = vdwg.mxu0
        %v1635 = vpack.c.bf16 %v1624, %v1621
        %v1636 = vpack.c.bf16 %v1632, %v1629
        %v1637 = vlaneseq
        %v1638 = vshrl.u32 %v1637, 7
        %v1639 = vadd.s32 %v1638, 8
        %v1640 = vld [vmem:[%s594] sm:$0x1]
        %v1641 = vld [vmem:[%s594 + $0x1] sm:$0x1]
        %v1642 = vlaneseq
        %v1643 = vshrl.u32 %v1642, 7
        %v1644 = vsub.s32 0, %v1643
        %v1645 = vrot.slane %v1640, %v1644
        %v1646 = vlaneseq
        %v1647 = vshrl.u32 %v1646, 7
        %v1648 = vsub.s32 0, %v1647
        %v1649 = vrot.slane %v1641, %v1648
        %vm1650 = vcmp.eq.s32.totalorder %v1638, %v1645
        %vm1651 = vcmp.eq.s32.totalorder %v1639, %v1645
        %vm1652 = vcmp.eq.s32.totalorder %v1638, %v1649
        %vm1653 = vcmp.eq.s32.totalorder %v1639, %v1649
        %v1654 = vsel %vm1650, 1.0, 0.0
        %v1655 = vsel %vm1651, 1.0, 0.0
        %v1656 = vsel %vm1652, 1.0, 0.0
        %v1657 = vsel %vm1653, 1.0, 0.0
        %v1658 = vpack.c.bf16 %v1655, %v1654
        %v1659 = vpack.c.bf16 %v1657, %v1656
        %v1660 = vld [vmem:[%s599] sm:$0x1]
        %v1661 = vld [vmem:[%s599 + $0x1] sm:$0x1]
        %v1662 = vlaneseq
        %v1663 = vshrl.u32 %v1662, 7
        %v1664 = vsub.s32 0, %v1663
        %v1665 = vrot.slane %v1660, %v1664
        %v1666 = vlaneseq
        %v1667 = vshrl.u32 %v1666, 7
        %v1668 = vsub.s32 0, %v1667
        %v1669 = vrot.slane %v1661, %v1668
        %vm1670 = vcmp.eq.s32.totalorder %v1638, %v1665
        %vm1671 = vcmp.eq.s32.totalorder %v1639, %v1665
        %vm1672 = vcmp.eq.s32.totalorder %v1638, %v1669
        %vm1673 = vcmp.eq.s32.totalorder %v1639, %v1669
        %v1674 = vsel %vm1670, 1.0, 0.0
        %v1675 = vsel %vm1671, 1.0, 0.0
        %v1676 = vsel %vm1672, 1.0, 0.0
        %v1677 = vsel %vm1673, 1.0, 0.0
        %v1678 = vpack.c.bf16 %v1675, %v1674
        %v1679 = vpack.c.bf16 %v1677, %v1676
        %1680 = vxpose.xlu0.c.b16.start [1/8] %v1678, 128
        %1681 = vxpose.xlu0.c.b16.cont [2/8] 0, 128
        %1682 = vxpose.xlu0.c.b16.cont [3/8] 0, 128
        %1683 = vxpose.xlu0.c.b16.cont [4/8] 0, 128
        %1684 = vxpose.xlu0.c.b16.cont [5/8] 0, 128
        %1685 = vxpose.xlu0.c.b16.cont [6/8] 0, 128
        %1686 = vxpose.xlu0.c.b16.cont [7/8] 0, 128
        %1687 = vxpose.xlu0.c.b16.end [8/8] 0, 128
        %v1688 = vpop.trf.xlu0
        %v1689 = vpop.trf.xlu0
        %v1690 = vpop.trf.xlu0
        %v1691 = vpop.trf.xlu0
        %v1692 = vpop.trf.xlu0
        %v1693 = vpop.trf.xlu0
        %v1694 = vpop.trf.xlu0
        %v1695 = vpop.trf.xlu0
        %v1697 = vsel %vm864, %v1688, 0
        %v1700 = vsel %vm864, %v1689, 0
        %v1703 = vsel %vm864, %v1690, 0
        %v1706 = vsel %vm864, %v1691, 0
        %v1709 = vsel %vm864, %v1692, 0
        %v1712 = vsel %vm864, %v1693, 0
        %v1715 = vsel %vm864, %v1694, 0
        %v1718 = vsel %vm864, %v1695, 0
        %1720 = vmatprep.subr.bf16.mxu0 0
        %1721 = vmatpush1.bf16.msra.mxu0 %v1635
        %1722 = vmatprep.subr.bf16.mxu0 0
        %1723 = vmatpush1.bf16.msra.mxu0 0
        %1724 = vmatprep.subr.bf16.mxu0 0
        %1725 = vmatpush1.bf16.msra.mxu0 0
        %1726 = vmatprep.subr.bf16.mxu0 0
        %1727 = vmatpush1.bf16.msra.mxu0 0
        %1728 = vmatprep.subr.bf16.mxu0 0
        %1729 = vmatpush1.bf16.msra.mxu0 0
        %1730 = vmatprep.subr.bf16.mxu0 0
        %1731 = vmatpush1.bf16.msra.mxu0 0
        %1732 = vmatprep.subr.bf16.mxu0 0
        %1733 = vmatpush1.bf16.msra.mxu0 0
        %1734 = vmatprep.subr.bf16.mxu0 0
        %1735 = vmatpush1.bf16.msra.mxu0 0
        %1736 = vmatprep.subr.bf16.mxu0 0
        %1737 = vmatpush1.bf16.msra.mxu0 0
        %1738 = vmatprep.subr.bf16.mxu0 0
        %1739 = vmatpush1.bf16.msra.mxu0 0
        %1740 = vmatprep.subr.bf16.mxu0 0
        %1741 = vmatpush1.bf16.msra.mxu0 0
        %1742 = vmatprep.subr.bf16.mxu0 0
        %1743 = vmatpush1.bf16.msra.mxu0 0
        %1744 = vmatprep.subr.bf16.mxu0 0
        %1745 = vmatpush1.bf16.msra.mxu0 0
        %1746 = vmatprep.subr.bf16.mxu0 0
        %1747 = vmatpush1.bf16.msra.mxu0 0
        %1748 = vmatprep.subr.bf16.mxu0 0
        %1749 = vmatpush1.bf16.msra.mxu0 0
        %1750 = vmatprep.subr.bf16.mxu0 0
        %1751 = vmatpush1.bf16.msra.mxu0 0
        %1752 = vmatprep.mubr.bf16.mxu0 0
        %1753 = vmatmul.mubr.bf16.gmra.mrb[0].mxu0 %v1697
        %v1754 = vpop.f32.mrb[0].mxu0
        %v1755 = vadd.f32 0.0, %v1754
        %v1756 = vpop.f32.mrb[0].mxu0
        %v1757 = vpop.f32.mrb[0].mxu0
        %v1758 = vadd.f32 0.0, %v1757
        %v1759 = vpop.f32.mrb[0].mxu0
        %1760 = vmatprep.mubr.bf16.mxu0 0
        %1761 = vmatmul.mubr.bf16.gmra.mrb[0].mxu0 %v1700
        %v1762 = vpop.f32.mrb[0].mxu0
        %v1763 = vadd.f32 0.0, %v1762
        %v1764 = vpop.f32.mrb[0].mxu0
        %v1765 = vpop.f32.mrb[0].mxu0
        %v1766 = vadd.f32 0.0, %v1765
        %v1767 = vpop.f32.mrb[0].mxu0
        %1768 = vmatprep.mubr.bf16.mxu0 0
        %1769 = vmatmul.mubr.bf16.gmra.mrb[0].mxu0 %v1703
        %v1770 = vpop.f32.mrb[0].mxu0
        %v1771 = vadd.f32 0.0, %v1770
        %v1772 = vpop.f32.mrb[0].mxu0
        %v1773 = vpop.f32.mrb[0].mxu0
        %v1774 = vadd.f32 0.0, %v1773
        %v1775 = vpop.f32.mrb[0].mxu0
        %1776 = vmatprep.mubr.bf16.mxu0 0
        %1777 = vmatmul.mubr.bf16.gmra.mrb[0].mxu0 %v1706
        %v1778 = vpop.f32.mrb[0].mxu0
        %v1779 = vadd.f32 0.0, %v1778
        %v1780 = vpop.f32.mrb[0].mxu0
        %v1781 = vpop.f32.mrb[0].mxu0
        %v1782 = vadd.f32 0.0, %v1781
        %v1783 = vpop.f32.mrb[0].mxu0
        %1784 = vmatprep.mubr.bf16.mxu0 0
        %1785 = vmatmul.mubr.bf16.gmra.mrb[0].mxu0 %v1709
        %v1786 = vpop.f32.mrb[0].mxu0
        %v1787 = vadd.f32 0.0, %v1786
        %v1788 = vpop.f32.mrb[0].mxu0
        %v1789 = vpop.f32.mrb[0].mxu0
        %v1790 = vadd.f32 0.0, %v1789
        %v1791 = vpop.f32.mrb[0].mxu0
        %1792 = vmatprep.mubr.bf16.mxu0 0
        %1793 = vmatmul.mubr.bf16.gmra.mrb[0].mxu0 %v1712
        %v1794 = vpop.f32.mrb[0].mxu0
        %v1795 = vadd.f32 0.0, %v1794
        %v1796 = vpop.f32.mrb[0].mxu0
        %v1797 = vpop.f32.mrb[0].mxu0
        %v1798 = vadd.f32 0.0, %v1797
        %v1799 = vpop.f32.mrb[0].mxu0
        %1800 = vmatprep.mubr.bf16.mxu0 0
        %1801 = vmatmul.mubr.bf16.gmra.mrb[0].mxu0 %v1715
        %v1802 = vpop.f32.mrb[0].mxu0
        %v1803 = vadd.f32 0.0, %v1802
        %v1804 = vpop.f32.mrb[0].mxu0
        %v1805 = vpop.f32.mrb[0].mxu0
        %v1806 = vadd.f32 0.0, %v1805
        %v1807 = vpop.f32.mrb[0].mxu0
        %1808 = vmatprep.mubr.bf16.mxu0 0
        %1809 = vmatmul.mubr.bf16.gmra.mrb[0].mxu0 %v1718
        %v1810 = vpop.f32.mrb[0].mxu0
        %v1811 = vadd.f32 0.0, %v1810
        %v1812 = vpop.f32.mrb[0].mxu0
        %v1813 = vpop.f32.mrb[0].mxu0
        %v1814 = vadd.f32 0.0, %v1813
        %v1815 = vpop.f32.mrb[0].mxu0
        %1816 = vdwg.mxu0
        %1817 = vxpose.xlu0.c.b16.start [1/8] %v1679, 128
        %1818 = vxpose.xlu0.c.b16.cont [2/8] 0, 128
        %1819 = vxpose.xlu0.c.b16.cont [3/8] 0, 128
        %1820 = vxpose.xlu0.c.b16.cont [4/8] 0, 128
        %1821 = vxpose.xlu0.c.b16.cont [5/8] 0, 128
        %1822 = vxpose.xlu0.c.b16.cont [6/8] 0, 128
        %1823 = vxpose.xlu0.c.b16.cont [7/8] 0, 128
        %1824 = vxpose.xlu0.c.b16.end [8/8] 0, 128
        %v1825 = vpop.trf.xlu0
        %v1826 = vpop.trf.xlu0
        %v1827 = vpop.trf.xlu0
        %v1828 = vpop.trf.xlu0
        %v1829 = vpop.trf.xlu0
        %v1830 = vpop.trf.xlu0
        %v1831 = vpop.trf.xlu0
        %v1832 = vpop.trf.xlu0
        %v1834 = vsel %vm864, %v1825, 0
        %v1837 = vsel %vm864, %v1826, 0
        %v1840 = vsel %vm864, %v1827, 0
        %v1843 = vsel %vm864, %v1828, 0
        %v1846 = vsel %vm864, %v1829, 0
        %v1849 = vsel %vm864, %v1830, 0
        %v1852 = vsel %vm864, %v1831, 0
        %v1855 = vsel %vm864, %v1832, 0
        %1857 = vmatprep.subr.bf16.mxu0 0
        %1858 = vmatpush1.bf16.msra.mxu0 %v1636
        %1859 = vmatprep.subr.bf16.mxu0 0
        %1860 = vmatpush1.bf16.msra.mxu0 0
        %1861 = vmatprep.subr.bf16.mxu0 0
        %1862 = vmatpush1.bf16.msra.mxu0 0
        %1863 = vmatprep.subr.bf16.mxu0 0
        %1864 = vmatpush1.bf16.msra.mxu0 0
        %1865 = vmatprep.subr.bf16.mxu0 0
        %1866 = vmatpush1.bf16.msra.mxu0 0
        %1867 = vmatprep.subr.bf16.mxu0 0
        %1868 = vmatpush1.bf16.msra.mxu0 0
        %1869 = vmatprep.subr.bf16.mxu0 0
        %1870 = vmatpush1.bf16.msra.mxu0 0
        %1871 = vmatprep.subr.bf16.mxu0 0
        %1872 = vmatpush1.bf16.msra.mxu0 0
        %1873 = vmatprep.subr.bf16.mxu0 0
        %1874 = vmatpush1.bf16.msra.mxu0 0
        %1875 = vmatprep.subr.bf16.mxu0 0
        %1876 = vmatpush1.bf16.msra.mxu0 0
        %1877 = vmatprep.subr.bf16.mxu0 0
        %1878 = vmatpush1.bf16.msra.mxu0 0
        %1879 = vmatprep.subr.bf16.mxu0 0
        %1880 = vmatpush1.bf16.msra.mxu0 0
        %1881 = vmatprep.subr.bf16.mxu0 0
        %1882 = vmatpush1.bf16.msra.mxu0 0
        %1883 = vmatprep.subr.bf16.mxu0 0
        %1884 = vmatpush1.bf16.msra.mxu0 0
        %1885 = vmatprep.subr.bf16.mxu0 0
        %1886 = vmatpush1.bf16.msra.mxu0 0
        %1887 = vmatprep.subr.bf16.mxu0 0
        %1888 = vmatpush1.bf16.msra.mxu0 0
        %1889 = vmatprep.mubr.bf16.mxu0 0
        %1890 = vmatmul.mubr.bf16.gmra.mrb[0].mxu0 %v1834
        %v1891 = vpop.f32.mrb[0].mxu0
        %v1892 = vadd.f32 0.0, %v1891
        %v1893 = vpop.f32.mrb[0].mxu0
        %v1894 = vpop.f32.mrb[0].mxu0
        %v1895 = vadd.f32 0.0, %v1894
        %v1896 = vpop.f32.mrb[0].mxu0
        %1897 = vmatprep.mubr.bf16.mxu0 0
        %1898 = vmatmul.mubr.bf16.gmra.mrb[0].mxu0 %v1837
        %v1899 = vpop.f32.mrb[0].mxu0
        %v1900 = vadd.f32 0.0, %v1899
        %v1901 = vpop.f32.mrb[0].mxu0
        %v1902 = vpop.f32.mrb[0].mxu0
        %v1903 = vadd.f32 0.0, %v1902
        %v1904 = vpop.f32.mrb[0].mxu0
        %1905 = vmatprep.mubr.bf16.mxu0 0
        %1906 = vmatmul.mubr.bf16.gmra.mrb[0].mxu0 %v1840
        %v1907 = vpop.f32.mrb[0].mxu0
        %v1908 = vadd.f32 0.0, %v1907
        %v1909 = vpop.f32.mrb[0].mxu0
        %v1910 = vpop.f32.mrb[0].mxu0
        %v1911 = vadd.f32 0.0, %v1910
        %v1912 = vpop.f32.mrb[0].mxu0
        %1913 = vmatprep.mubr.bf16.mxu0 0
        %1914 = vmatmul.mubr.bf16.gmra.mrb[0].mxu0 %v1843
        %v1915 = vpop.f32.mrb[0].mxu0
        %v1916 = vadd.f32 0.0, %v1915
        %v1917 = vpop.f32.mrb[0].mxu0
        %v1918 = vpop.f32.mrb[0].mxu0
        %v1919 = vadd.f32 0.0, %v1918
        %v1920 = vpop.f32.mrb[0].mxu0
        %1921 = vmatprep.mubr.bf16.mxu0 0
        %1922 = vmatmul.mubr.bf16.gmra.mrb[0].mxu0 %v1846
        %v1923 = vpop.f32.mrb[0].mxu0
        %v1924 = vadd.f32 0.0, %v1923
        %v1925 = vpop.f32.mrb[0].mxu0
        %v1926 = vpop.f32.mrb[0].mxu0
        %v1927 = vadd.f32 0.0, %v1926
        %v1928 = vpop.f32.mrb[0].mxu0
        %1929 = vmatprep.mubr.bf16.mxu0 0
        %1930 = vmatmul.mubr.bf16.gmra.mrb[0].mxu0 %v1849
        %v1931 = vpop.f32.mrb[0].mxu0
        %v1932 = vadd.f32 0.0, %v1931
        %v1933 = vpop.f32.mrb[0].mxu0
        %v1934 = vpop.f32.mrb[0].mxu0
        %v1935 = vadd.f32 0.0, %v1934
        %v1936 = vpop.f32.mrb[0].mxu0
        %1937 = vmatprep.mubr.bf16.mxu0 0
        %1938 = vmatmul.mubr.bf16.gmra.mrb[0].mxu0 %v1852
        %v1939 = vpop.f32.mrb[0].mxu0
        %v1940 = vadd.f32 0.0, %v1939
        %v1941 = vpop.f32.mrb[0].mxu0
        %v1942 = vpop.f32.mrb[0].mxu0
        %v1943 = vadd.f32 0.0, %v1942
        %v1944 = vpop.f32.mrb[0].mxu0
        %1945 = vmatprep.mubr.bf16.mxu0 0
        %1946 = vmatmul.mubr.bf16.gmra.mrb[0].mxu0 %v1855
        %v1947 = vpop.f32.mrb[0].mxu0
        %v1948 = vadd.f32 0.0, %v1947
        %v1949 = vpop.f32.mrb[0].mxu0
        %v1950 = vpop.f32.mrb[0].mxu0
        %v1951 = vadd.f32 0.0, %v1950
        %v1952 = vpop.f32.mrb[0].mxu0
        %1953 = vdwg.mxu0
        %1954 = vxpose.xlu0.c.b16.start [1/8] %v1658, 128
        %1955 = vxpose.xlu0.c.b16.cont [2/8] 0, 128
        %1956 = vxpose.xlu0.c.b16.cont [3/8] 0, 128
        %1957 = vxpose.xlu0.c.b16.cont [4/8] 0, 128
        %1958 = vxpose.xlu0.c.b16.cont [5/8] 0, 128
        %1959 = vxpose.xlu0.c.b16.cont [6/8] 0, 128
        %1960 = vxpose.xlu0.c.b16.cont [7/8] 0, 128
        %1961 = vxpose.xlu0.c.b16.end [8/8] 0, 128
        %v1962 = vpop.trf.xlu0
        %v1963 = vpop.trf.xlu0
        %v1964 = vpop.trf.xlu0
        %v1965 = vpop.trf.xlu0
        %v1966 = vpop.trf.xlu0
        %v1967 = vpop.trf.xlu0
        %v1968 = vpop.trf.xlu0
        %v1969 = vpop.trf.xlu0
        %v1971 = vsel %vm864, %v1962, 0
        %v1974 = vsel %vm864, %v1963, 0
        %v1977 = vsel %vm864, %v1964, 0
        %v1980 = vsel %vm864, %v1965, 0
        %v1983 = vsel %vm864, %v1966, 0
        %v1986 = vsel %vm864, %v1967, 0
        %v1989 = vsel %vm864, %v1968, 0
        %v1992 = vsel %vm864, %v1969, 0
        %1994 = vmatprep.subr.bf16.mxu0 0
        %1995 = vmatpush1.bf16.msra.mxu0 %v1520
        %1996 = vmatprep.subr.bf16.mxu0 0
        %1997 = vmatpush1.bf16.msra.mxu0 0
        %1998 = vmatprep.subr.bf16.mxu0 0
        %1999 = vmatpush1.bf16.msra.mxu0 0
        %2000 = vmatprep.subr.bf16.mxu0 0
        %2001 = vmatpush1.bf16.msra.mxu0 0
        %2002 = vmatprep.subr.bf16.mxu0 0
        %2003 = vmatpush1.bf16.msra.mxu0 0
        %2004 = vmatprep.subr.bf16.mxu0 0
        %2005 = vmatpush1.bf16.msra.mxu0 0
        %2006 = vmatprep.subr.bf16.mxu0 0
        %2007 = vmatpush1.bf16.msra.mxu0 0
        %2008 = vmatprep.subr.bf16.mxu0 0
        %2009 = vmatpush1.bf16.msra.mxu0 0
        %2010 = vmatprep.subr.bf16.mxu0 0
        %2011 = vmatpush1.bf16.msra.mxu0 0
        %2012 = vmatprep.subr.bf16.mxu0 0
        %2013 = vmatpush1.bf16.msra.mxu0 0
        %2014 = vmatprep.subr.bf16.mxu0 0
        %2015 = vmatpush1.bf16.msra.mxu0 0
        %2016 = vmatprep.subr.bf16.mxu0 0
        %2017 = vmatpush1.bf16.msra.mxu0 0
        %2018 = vmatprep.subr.bf16.mxu0 0
        %2019 = vmatpush1.bf16.msra.mxu0 0
        %2020 = vmatprep.subr.bf16.mxu0 0
        %2021 = vmatpush1.bf16.msra.mxu0 0
        %2022 = vmatprep.subr.bf16.mxu0 0
        %2023 = vmatpush1.bf16.msra.mxu0 0
        %2024 = vmatprep.subr.bf16.mxu0 0
        %2025 = vmatpush1.bf16.msra.mxu0 0
        %2026 = vmatprep.mubr.bf16.mxu0 0
        %2027 = vmatmul.mubr.bf16.gmra.mrb[0].mxu0 %v1971
        %v2028 = vpop.f32.mrb[0].mxu0
        %v2029 = vadd.f32 %v1755, %v2028
        %v2030 = vpop.f32.mrb[0].mxu0
        %v2031 = vpop.f32.mrb[0].mxu0
        %v2032 = vadd.f32 %v1758, %v2031
        %v2033 = vpop.f32.mrb[0].mxu0
        %2034 = vmatprep.mubr.bf16.mxu0 0
        %2035 = vmatmul.mubr.bf16.gmra.mrb[0].mxu0 %v1974
        %v2036 = vpop.f32.mrb[0].mxu0
        %v2037 = vadd.f32 %v1763, %v2036
        %v2038 = vpop.f32.mrb[0].mxu0
        %v2039 = vpop.f32.mrb[0].mxu0
        %v2040 = vadd.f32 %v1766, %v2039
        %v2041 = vpop.f32.mrb[0].mxu0
        %2042 = vmatprep.mubr.bf16.mxu0 0
        %2043 = vmatmul.mubr.bf16.gmra.mrb[0].mxu0 %v1977
        %v2044 = vpop.f32.mrb[0].mxu0
        %v2045 = vadd.f32 %v1771, %v2044
        %v2046 = vpop.f32.mrb[0].mxu0
        %v2047 = vpop.f32.mrb[0].mxu0
        %v2048 = vadd.f32 %v1774, %v2047
        %v2049 = vpop.f32.mrb[0].mxu0
        %2050 = vmatprep.mubr.bf16.mxu0 0
        %2051 = vmatmul.mubr.bf16.gmra.mrb[0].mxu0 %v1980
        %v2052 = vpop.f32.mrb[0].mxu0
        %v2053 = vadd.f32 %v1779, %v2052
        %v2054 = vpop.f32.mrb[0].mxu0
        %v2055 = vpop.f32.mrb[0].mxu0
        %v2056 = vadd.f32 %v1782, %v2055
        %v2057 = vpop.f32.mrb[0].mxu0
        %2058 = vmatprep.mubr.bf16.mxu0 0
        %2059 = vmatmul.mubr.bf16.gmra.mrb[0].mxu0 %v1983
        %v2060 = vpop.f32.mrb[0].mxu0
        %v2061 = vadd.f32 %v1787, %v2060
        %v2062 = vpop.f32.mrb[0].mxu0
        %v2063 = vpop.f32.mrb[0].mxu0
        %v2064 = vadd.f32 %v1790, %v2063
        %v2065 = vpop.f32.mrb[0].mxu0
        %2066 = vmatprep.mubr.bf16.mxu0 0
        %2067 = vmatmul.mubr.bf16.gmra.mrb[0].mxu0 %v1986
        %v2068 = vpop.f32.mrb[0].mxu0
        %v2069 = vadd.f32 %v1795, %v2068
        %v2070 = vpop.f32.mrb[0].mxu0
        %v2071 = vpop.f32.mrb[0].mxu0
        %v2072 = vadd.f32 %v1798, %v2071
        %v2073 = vpop.f32.mrb[0].mxu0
        %2074 = vmatprep.mubr.bf16.mxu0 0
        %2075 = vmatmul.mubr.bf16.gmra.mrb[0].mxu0 %v1989
        %v2076 = vpop.f32.mrb[0].mxu0
        %v2077 = vadd.f32 %v1803, %v2076
        %v2078 = vpop.f32.mrb[0].mxu0
        %v2079 = vpop.f32.mrb[0].mxu0
        %v2080 = vadd.f32 %v1806, %v2079
        %v2081 = vpop.f32.mrb[0].mxu0
        %2082 = vmatprep.mubr.bf16.mxu0 0
        %2083 = vmatmul.mubr.bf16.gmra.mrb[0].mxu0 %v1992
        %v2084 = vpop.f32.mrb[0].mxu0
        %v2085 = vadd.f32 %v1811, %v2084
        %v2086 = vpop.f32.mrb[0].mxu0
        %v2087 = vpop.f32.mrb[0].mxu0
        %v2088 = vadd.f32 %v1814, %v2087
        %v2089 = vpop.f32.mrb[0].mxu0
        %2090 = vdwg.mxu0
        %2091 = vxpose.xlu0.c.b16.start [1/8] %v1659, 128
        %2092 = vxpose.xlu0.c.b16.cont [2/8] 0, 128
        %2093 = vxpose.xlu0.c.b16.cont [3/8] 0, 128
        %2094 = vxpose.xlu0.c.b16.cont [4/8] 0, 128
        %2095 = vxpose.xlu0.c.b16.cont [5/8] 0, 128
        %2096 = vxpose.xlu0.c.b16.cont [6/8] 0, 128
        %2097 = vxpose.xlu0.c.b16.cont [7/8] 0, 128
        %2098 = vxpose.xlu0.c.b16.end [8/8] 0, 128
        %v2099 = vpop.trf.xlu0
        %v2100 = vpop.trf.xlu0
        %v2101 = vpop.trf.xlu0
        %v2102 = vpop.trf.xlu0
        %v2103 = vpop.trf.xlu0
        %v2104 = vpop.trf.xlu0
        %v2105 = vpop.trf.xlu0
        %v2106 = vpop.trf.xlu0
        %v2108 = vsel %vm864, %v2099, 0
        %v2111 = vsel %vm864, %v2100, 0
        %v2114 = vsel %vm864, %v2101, 0
        %v2117 = vsel %vm864, %v2102, 0
        %v2120 = vsel %vm864, %v2103, 0
        %v2123 = vsel %vm864, %v2104, 0
        %v2126 = vsel %vm864, %v2105, 0
        %v2129 = vsel %vm864, %v2106, 0
        %2131 = vmatprep.subr.bf16.mxu0 0
        %2132 = vmatpush1.bf16.msra.mxu0 %v1521
        %2133 = vmatprep.subr.bf16.mxu0 0
        %2134 = vmatpush1.bf16.msra.mxu0 0
        %2135 = vmatprep.subr.bf16.mxu0 0
        %2136 = vmatpush1.bf16.msra.mxu0 0
        %2137 = vmatprep.subr.bf16.mxu0 0
        %2138 = vmatpush1.bf16.msra.mxu0 0
        %2139 = vmatprep.subr.bf16.mxu0 0
        %2140 = vmatpush1.bf16.msra.mxu0 0
        %2141 = vmatprep.subr.bf16.mxu0 0
        %2142 = vmatpush1.bf16.msra.mxu0 0
        %2143 = vmatprep.subr.bf16.mxu0 0
        %2144 = vmatpush1.bf16.msra.mxu0 0
        %2145 = vmatprep.subr.bf16.mxu0 0
        %2146 = vmatpush1.bf16.msra.mxu0 0
        %2147 = vmatprep.subr.bf16.mxu0 0
        %2148 = vmatpush1.bf16.msra.mxu0 0
        %2149 = vmatprep.subr.bf16.mxu0 0
        %2150 = vmatpush1.bf16.msra.mxu0 0
        %2151 = vmatprep.subr.bf16.mxu0 0
        %2152 = vmatpush1.bf16.msra.mxu0 0
        %2153 = vmatprep.subr.bf16.mxu0 0
        %2154 = vmatpush1.bf16.msra.mxu0 0
        %2155 = vmatprep.subr.bf16.mxu0 0
        %2156 = vmatpush1.bf16.msra.mxu0 0
        %2157 = vmatprep.subr.bf16.mxu0 0
        %2158 = vmatpush1.bf16.msra.mxu0 0
        %2159 = vmatprep.subr.bf16.mxu0 0
        %2160 = vmatpush1.bf16.msra.mxu0 0
        %2161 = vmatprep.subr.bf16.mxu0 0
        %2162 = vmatpush1.bf16.msra.mxu0 0
        %2163 = vmatprep.mubr.bf16.mxu0 0
        %2164 = vmatmul.mubr.bf16.gmra.mrb[0].mxu0 %v2108
        %v2165 = vpop.f32.mrb[0].mxu0
        %v2166 = vadd.f32 %v1892, %v2165
        %v2167 = vpop.f32.mrb[0].mxu0
        %v2168 = vpop.f32.mrb[0].mxu0
        %v2169 = vadd.f32 %v1895, %v2168
        %v2170 = vpop.f32.mrb[0].mxu0
        %2171 = vmatprep.mubr.bf16.mxu0 0
        %2172 = vmatmul.mubr.bf16.gmra.mrb[0].mxu0 %v2111
        %v2173 = vpop.f32.mrb[0].mxu0
        %v2174 = vadd.f32 %v1900, %v2173
        %v2175 = vpop.f32.mrb[0].mxu0
        %v2176 = vpop.f32.mrb[0].mxu0
        %v2177 = vadd.f32 %v1903, %v2176
        %v2178 = vpop.f32.mrb[0].mxu0
        %2179 = vmatprep.mubr.bf16.mxu0 0
        %2180 = vmatmul.mubr.bf16.gmra.mrb[0].mxu0 %v2114
        %v2181 = vpop.f32.mrb[0].mxu0
        %v2182 = vadd.f32 %v1908, %v2181
        %v2183 = vpop.f32.mrb[0].mxu0
        %v2184 = vpop.f32.mrb[0].mxu0
        %v2185 = vadd.f32 %v1911, %v2184
        %v2186 = vpop.f32.mrb[0].mxu0
        %2187 = vmatprep.mubr.bf16.mxu0 0
        %2188 = vmatmul.mubr.bf16.gmra.mrb[0].mxu0 %v2117
        %v2189 = vpop.f32.mrb[0].mxu0
        %v2190 = vadd.f32 %v1916, %v2189
        %v2191 = vpop.f32.mrb[0].mxu0
        %v2192 = vpop.f32.mrb[0].mxu0
        %v2193 = vadd.f32 %v1919, %v2192
        %v2194 = vpop.f32.mrb[0].mxu0
        %2195 = vmatprep.mubr.bf16.mxu0 0
        %2196 = vmatmul.mubr.bf16.gmra.mrb[0].mxu0 %v2120
        %v2197 = vpop.f32.mrb[0].mxu0
        %v2198 = vadd.f32 %v1924, %v2197
        %v2199 = vpop.f32.mrb[0].mxu0
        %v2200 = vpop.f32.mrb[0].mxu0
        %v2201 = vadd.f32 %v1927, %v2200
        %v2202 = vpop.f32.mrb[0].mxu0
        %2203 = vmatprep.mubr.bf16.mxu0 0
        %2204 = vmatmul.mubr.bf16.gmra.mrb[0].mxu0 %v2123
        %v2205 = vpop.f32.mrb[0].mxu0
        %v2206 = vadd.f32 %v1932, %v2205
        %v2207 = vpop.f32.mrb[0].mxu0
        %v2208 = vpop.f32.mrb[0].mxu0
        %v2209 = vadd.f32 %v1935, %v2208
        %v2210 = vpop.f32.mrb[0].mxu0
        %2211 = vmatprep.mubr.bf16.mxu0 0
        %2212 = vmatmul.mubr.bf16.gmra.mrb[0].mxu0 %v2126
        %v2213 = vpop.f32.mrb[0].mxu0
        %v2214 = vadd.f32 %v1940, %v2213
        %v2215 = vpop.f32.mrb[0].mxu0
        %v2216 = vpop.f32.mrb[0].mxu0
        %v2217 = vadd.f32 %v1943, %v2216
        %v2218 = vpop.f32.mrb[0].mxu0
        %2219 = vmatprep.mubr.bf16.mxu0 0
        %2220 = vmatmul.mubr.bf16.gmra.mrb[0].mxu0 %v2129
        %v2221 = vpop.f32.mrb[0].mxu0
        %v2222 = vadd.f32 %v1948, %v2221
        %v2223 = vpop.f32.mrb[0].mxu0
        %v2224 = vpop.f32.mrb[0].mxu0
        %v2225 = vadd.f32 %v1951, %v2224
        %v2226 = vpop.f32.mrb[0].mxu0
        %2227 = vdwg.mxu0
        %v2228 = vld [vmem:[%s10] sm:$0x1]
        %v2230 = vlaneseq
        %v2231 = vshrl.u32 %v2230, 7
        %v2232 = vsub.s32 0, %v2231
        %v2233 = vrot.slane %v2228, %v2232
        %v2235 = vadd.f32 %v2029, %v2233
        %v2236 = vadd.f32 %v2032, %v2233
        %v2237 = vadd.f32 %v2037, %v2233
        %v2238 = vadd.f32 %v2040, %v2233
        %v2239 = vadd.f32 %v2045, %v2233
        %v2240 = vadd.f32 %v2048, %v2233
        %v2241 = vadd.f32 %v2053, %v2233
        %v2242 = vadd.f32 %v2056, %v2233
        %v2243 = vadd.f32 %v2061, %v2233
        %v2244 = vadd.f32 %v2064, %v2233
        %v2245 = vadd.f32 %v2069, %v2233
        %v2246 = vadd.f32 %v2072, %v2233
        %v2247 = vadd.f32 %v2077, %v2233
        %v2248 = vadd.f32 %v2080, %v2233
        %v2249 = vadd.f32 %v2085, %v2233
        %v2250 = vadd.f32 %v2088, %v2233
        %v2251 = vadd.f32 %v2166, %v2233
        %v2252 = vadd.f32 %v2169, %v2233
        %v2253 = vadd.f32 %v2174, %v2233
        %v2254 = vadd.f32 %v2177, %v2233
        %v2255 = vadd.f32 %v2182, %v2233
        %v2256 = vadd.f32 %v2185, %v2233
        %v2257 = vadd.f32 %v2190, %v2233
        %v2258 = vadd.f32 %v2193, %v2233
        %v2259 = vadd.f32 %v2198, %v2233
        %v2260 = vadd.f32 %v2201, %v2233
        %v2261 = vadd.f32 %v2206, %v2233
        %v2262 = vadd.f32 %v2209, %v2233
        %v2263 = vadd.f32 %v2214, %v2233
        %v2264 = vadd.f32 %v2217, %v2233
        %v2265 = vadd.f32 %v2222, %v2233
        %v2266 = vadd.f32 %v2225, %v2233
        %v2267 = vmax.f32 %v2235, 0.0
        %v2268 = vmax.f32 %v2236, 0.0
        %v2269 = vmax.f32 %v2237, 0.0
        %v2270 = vmax.f32 %v2238, 0.0
        %v2271 = vmax.f32 %v2239, 0.0
        %v2272 = vmax.f32 %v2240, 0.0
        %v2273 = vmax.f32 %v2241, 0.0
        %v2274 = vmax.f32 %v2242, 0.0
        %v2275 = vmax.f32 %v2243, 0.0
        %v2276 = vmax.f32 %v2244, 0.0
        %v2277 = vmax.f32 %v2245, 0.0
        %v2278 = vmax.f32 %v2246, 0.0
        %v2279 = vmax.f32 %v2247, 0.0
        %v2280 = vmax.f32 %v2248, 0.0
        %v2281 = vmax.f32 %v2249, 0.0
        %v2282 = vmax.f32 %v2250, 0.0
        %v2283 = vmax.f32 %v2251, 0.0
        %v2284 = vmax.f32 %v2252, 0.0
        %v2285 = vmax.f32 %v2253, 0.0
        %v2286 = vmax.f32 %v2254, 0.0
        %v2287 = vmax.f32 %v2255, 0.0
        %v2288 = vmax.f32 %v2256, 0.0
        %v2289 = vmax.f32 %v2257, 0.0
        %v2290 = vmax.f32 %v2258, 0.0
        %v2291 = vmax.f32 %v2259, 0.0
        %v2292 = vmax.f32 %v2260, 0.0
        %v2293 = vmax.f32 %v2261, 0.0
        %v2294 = vmax.f32 %v2262, 0.0
        %v2295 = vmax.f32 %v2263, 0.0
        %v2296 = vmax.f32 %v2264, 0.0
        %v2297 = vmax.f32 %v2265, 0.0
        %v2298 = vmax.f32 %v2266, 0.0
        %v2299 = vld [vmem:[%s11] sm:$0x1]
        %v2301 = vlaneseq
        %v2302 = vshrl.u32 %v2301, 7
        %v2303 = vsub.s32 0, %v2302
        %v2304 = vrot.slane %v2299, %v2303
        %v2306 = vmul.f32 %v2267, %v2304
        %v2307 = vmul.f32 %v2268, %v2304
        %v2308 = vmul.f32 %v2269, %v2304
        %v2309 = vmul.f32 %v2270, %v2304
        %v2310 = vmul.f32 %v2271, %v2304
        %v2311 = vmul.f32 %v2272, %v2304
        %v2312 = vmul.f32 %v2273, %v2304
        %v2313 = vmul.f32 %v2274, %v2304
        %v2314 = vmul.f32 %v2275, %v2304
        %v2315 = vmul.f32 %v2276, %v2304
        %v2316 = vmul.f32 %v2277, %v2304
        %v2317 = vmul.f32 %v2278, %v2304
        %v2318 = vmul.f32 %v2279, %v2304
        %v2319 = vmul.f32 %v2280, %v2304
        %v2320 = vmul.f32 %v2281, %v2304
        %v2321 = vmul.f32 %v2282, %v2304
        %v2322 = vmul.f32 %v2283, %v2304
        %v2323 = vmul.f32 %v2284, %v2304
        %v2324 = vmul.f32 %v2285, %v2304
        %v2325 = vmul.f32 %v2286, %v2304
        %v2326 = vmul.f32 %v2287, %v2304
        %v2327 = vmul.f32 %v2288, %v2304
        %v2328 = vmul.f32 %v2289, %v2304
        %v2329 = vmul.f32 %v2290, %v2304
        %v2330 = vmul.f32 %v2291, %v2304
        %v2331 = vmul.f32 %v2292, %v2304
        %v2332 = vmul.f32 %v2293, %v2304
        %v2333 = vmul.f32 %v2294, %v2304
        %v2334 = vmul.f32 %v2295, %v2304
        %v2335 = vmul.f32 %v2296, %v2304
        %v2336 = vmul.f32 %v2297, %v2304
        %v2337 = vmul.f32 %v2298, %v2304
        %2338 = vadd.xlane.f32.xlu0 %v2306
        %v2339 = vpop.xlane.xlu0 %2338
        %2340 = vadd.xlane.f32.xlu0 %v2307
        %v2341 = vpop.xlane.xlu0 %2340
        %2342 = vadd.xlane.f32.xlu0 %v2308
        %v2343 = vpop.xlane.xlu0 %2342
        %2344 = vadd.xlane.f32.xlu0 %v2309
        %v2345 = vpop.xlane.xlu0 %2344
        %2346 = vadd.xlane.f32.xlu0 %v2310
        %v2347 = vpop.xlane.xlu0 %2346
        %2348 = vadd.xlane.f32.xlu0 %v2311
        %v2349 = vpop.xlane.xlu0 %2348
        %2350 = vadd.xlane.f32.xlu0 %v2312
        %v2351 = vpop.xlane.xlu0 %2350
        %2352 = vadd.xlane.f32.xlu0 %v2313
        %v2353 = vpop.xlane.xlu0 %2352
        %2354 = vadd.xlane.f32.xlu0 %v2314
        %v2355 = vpop.xlane.xlu0 %2354
        %2356 = vadd.xlane.f32.xlu0 %v2315
        %v2357 = vpop.xlane.xlu0 %2356
        %2358 = vadd.xlane.f32.xlu0 %v2316
        %v2359 = vpop.xlane.xlu0 %2358
        %2360 = vadd.xlane.f32.xlu0 %v2317
        %v2361 = vpop.xlane.xlu0 %2360
        %2362 = vadd.xlane.f32.xlu0 %v2318
        %v2363 = vpop.xlane.xlu0 %2362
        %2364 = vadd.xlane.f32.xlu0 %v2319
        %v2365 = vpop.xlane.xlu0 %2364
        %2366 = vadd.xlane.f32.xlu0 %v2320
        %v2367 = vpop.xlane.xlu0 %2366
        %2368 = vadd.xlane.f32.xlu0 %v2321
        %v2369 = vpop.xlane.xlu0 %2368
        %2370 = vadd.xlane.f32.xlu0 %v2322
        %v2371 = vpop.xlane.xlu0 %2370
        %2372 = vadd.xlane.f32.xlu0 %v2323
        %v2373 = vpop.xlane.xlu0 %2372
        %2374 = vadd.xlane.f32.xlu0 %v2324
        %v2375 = vpop.xlane.xlu0 %2374
        %2376 = vadd.xlane.f32.xlu0 %v2325
        %v2377 = vpop.xlane.xlu0 %2376
        %2378 = vadd.xlane.f32.xlu0 %v2326
        %v2379 = vpop.xlane.xlu0 %2378
        %2380 = vadd.xlane.f32.xlu0 %v2327
        %v2381 = vpop.xlane.xlu0 %2380
        %2382 = vadd.xlane.f32.xlu0 %v2328
        %v2383 = vpop.xlane.xlu0 %2382
        %2384 = vadd.xlane.f32.xlu0 %v2329
        %v2385 = vpop.xlane.xlu0 %2384
        %2386 = vadd.xlane.f32.xlu0 %v2330
        %v2387 = vpop.xlane.xlu0 %2386
        %2388 = vadd.xlane.f32.xlu0 %v2331
        %v2389 = vpop.xlane.xlu0 %2388
        %2390 = vadd.xlane.f32.xlu0 %v2332
        %v2391 = vpop.xlane.xlu0 %2390
        %2392 = vadd.xlane.f32.xlu0 %v2333
        %v2393 = vpop.xlane.xlu0 %2392
        %2394 = vadd.xlane.f32.xlu0 %v2334
        %v2395 = vpop.xlane.xlu0 %2394
        %2396 = vadd.xlane.f32.xlu0 %v2335
        %v2397 = vpop.xlane.xlu0 %2396
        %2398 = vadd.xlane.f32.xlu0 %v2336
        %v2399 = vpop.xlane.xlu0 %2398
        %2400 = vadd.xlane.f32.xlu0 %v2337
        %v2401 = vpop.xlane.xlu0 %2400
        %v2402 = vld [vmem:[#allocation2] sm:$0x1]
        %v2404 = vlaneseq
        %v2405 = vshrl.u32 %v2404, 7
        %v2406 = vsub.s32 0, %v2405
        %v2407 = vrot.slane %v2402, %v2406
        %2408 = vset.pattern.permute.xlu0 0
        %2409 = vperm.xlu0 %2408, %v2407
        %v2410 = vpop.permute.xlu0 %2409
        %v2412 = vadd.f32 %v2339, %v2410
        %v2413 = vadd.f32 %v2341, %v2410
        %v2414 = vadd.f32 %v2343, %v2410
        %v2415 = vadd.f32 %v2345, %v2410
        %v2416 = vadd.f32 %v2347, %v2410
        %v2417 = vadd.f32 %v2349, %v2410
        %v2418 = vadd.f32 %v2351, %v2410
        %v2419 = vadd.f32 %v2353, %v2410
        %v2420 = vadd.f32 %v2355, %v2410
        %v2421 = vadd.f32 %v2357, %v2410
        %v2422 = vadd.f32 %v2359, %v2410
        %v2423 = vadd.f32 %v2361, %v2410
        %v2424 = vadd.f32 %v2363, %v2410
        %v2425 = vadd.f32 %v2365, %v2410
        %v2426 = vadd.f32 %v2367, %v2410
        %v2427 = vadd.f32 %v2369, %v2410
        %v2428 = vadd.f32 %v2371, %v2410
        %v2429 = vadd.f32 %v2373, %v2410
        %v2430 = vadd.f32 %v2375, %v2410
        %v2431 = vadd.f32 %v2377, %v2410
        %v2432 = vadd.f32 %v2379, %v2410
        %v2433 = vadd.f32 %v2381, %v2410
        %v2434 = vadd.f32 %v2383, %v2410
        %v2435 = vadd.f32 %v2385, %v2410
        %v2436 = vadd.f32 %v2387, %v2410
        %v2437 = vadd.f32 %v2389, %v2410
        %v2438 = vadd.f32 %v2391, %v2410
        %v2439 = vadd.f32 %v2393, %v2410
        %v2440 = vadd.f32 %v2395, %v2410
        %v2441 = vadd.f32 %v2397, %v2410
        %v2442 = vadd.f32 %v2399, %v2410
        %v2443 = vadd.f32 %v2401, %v2410
        %v2476 = vlaneseq
        %v2477 = vand.u32 %v2476, 127
        %v2478 = vlaneseq
        %v2479 = vshrl.u32 %v2478, 7
        %v2480 = vsub.s32 %v2477, %v2479
        %v2481 = vrot.slane %v2412, %v2480
        %v2482 = vadd.s32 %v2477, 4294967288
        %v2483 = vlaneseq
        %v2484 = vshrl.u32 %v2483, 7
        %v2485 = vsub.s32 %v2482, %v2484
        %v2486 = vrot.slane %v2413, %v2485
        %vm2487 = vcmask 130112
        %v2488 = vsel %vm2487, %v2486, %v2481
        %v2489 = vadd.s32 %v2477, 4294967280
        %v2490 = vlaneseq
        %v2491 = vshrl.u32 %v2490, 7
        %v2492 = vsub.s32 %v2489, %v2491
        %v2493 = vrot.slane %v2414, %v2492
        %vm2494 = vcmask 195712
        %v2495 = vsel %vm2494, %v2493, %v2488
        %v2496 = vadd.s32 %v2477, 4294967272
        %v2497 = vlaneseq
        %v2498 = vshrl.u32 %v2497, 7
        %v2499 = vsub.s32 %v2496, %v2498
        %v2500 = vrot.slane %v2415, %v2499
        %vm2501 = vcmask 261312
        %v2502 = vsel %vm2501, %v2500, %v2495
        %v2503 = vadd.s32 %v2477, 4294967264
        %v2504 = vlaneseq
        %v2505 = vshrl.u32 %v2504, 7
        %v2506 = vsub.s32 %v2503, %v2505
        %v2507 = vrot.slane %v2416, %v2506
        %vm2508 = vcmask 326912
        %v2509 = vsel %vm2508, %v2507, %v2502
        %v2510 = vadd.s32 %v2477, 4294967256
        %v2511 = vlaneseq
        %v2512 = vshrl.u32 %v2511, 7
        %v2513 = vsub.s32 %v2510, %v2512
        %v2514 = vrot.slane %v2417, %v2513
        %vm2515 = vcmask 392512
        %v2516 = vsel %vm2515, %v2514, %v2509
        %v2517 = vadd.s32 %v2477, 4294967248
        %v2518 = vlaneseq
        %v2519 = vshrl.u32 %v2518, 7
        %v2520 = vsub.s32 %v2517, %v2519
        %v2521 = vrot.slane %v2418, %v2520
        %vm2522 = vcmask 458112
        %v2523 = vsel %vm2522, %v2521, %v2516
        %v2524 = vadd.s32 %v2477, 4294967240
        %v2525 = vlaneseq
        %v2526 = vshrl.u32 %v2525, 7
        %v2527 = vsub.s32 %v2524, %v2526
        %v2528 = vrot.slane %v2419, %v2527
        %vm2529 = vcmask 523712
        %v2530 = vsel %vm2529, %v2528, %v2523
        %v2531 = vadd.s32 %v2477, 4294967232
        %v2532 = vlaneseq
        %v2533 = vshrl.u32 %v2532, 7
        %v2534 = vsub.s32 %v2531, %v2533
        %v2535 = vrot.slane %v2420, %v2534
        %vm2536 = vcmask 589312
        %v2537 = vsel %vm2536, %v2535, %v2530
        %v2538 = vadd.s32 %v2477, 4294967224
        %v2539 = vlaneseq
        %v2540 = vshrl.u32 %v2539, 7
        %v2541 = vsub.s32 %v2538, %v2540
        %v2542 = vrot.slane %v2421, %v2541
        %vm2543 = vcmask 654912
        %v2544 = vsel %vm2543, %v2542, %v2537
        %v2545 = vadd.s32 %v2477, 4294967216
        %v2546 = vlaneseq
        %v2547 = vshrl.u32 %v2546, 7
        %v2548 = vsub.s32 %v2545, %v2547
        %v2549 = vrot.slane %v2422, %v2548
        %vm2550 = vcmask 720512
        %v2551 = vsel %vm2550, %v2549, %v2544
        %v2552 = vadd.s32 %v2477, 4294967208
        %v2553 = vlaneseq
        %v2554 = vshrl.u32 %v2553, 7
        %v2555 = vsub.s32 %v2552, %v2554
        %v2556 = vrot.slane %v2423, %v2555
        %vm2557 = vcmask 786112
        %v2558 = vsel %vm2557, %v2556, %v2551
        %v2559 = vadd.s32 %v2477, 4294967200
        %v2560 = vlaneseq
        %v2561 = vshrl.u32 %v2560, 7
        %v2562 = vsub.s32 %v2559, %v2561
        %v2563 = vrot.slane %v2424, %v2562
        %vm2564 = vcmask 851712
        %v2565 = vsel %vm2564, %v2563, %v2558
        %v2566 = vadd.s32 %v2477, 4294967192
        %v2567 = vlaneseq
        %v2568 = vshrl.u32 %v2567, 7
        %v2569 = vsub.s32 %v2566, %v2568
        %v2570 = vrot.slane %v2425, %v2569
        %vm2571 = vcmask 917312
        %v2572 = vsel %vm2571, %v2570, %v2565
        %v2573 = vadd.s32 %v2477, 4294967184
        %v2574 = vlaneseq
        %v2575 = vshrl.u32 %v2574, 7
        %v2576 = vsub.s32 %v2573, %v2575
        %v2577 = vrot.slane %v2426, %v2576
        %vm2578 = vcmask 982912
        %v2579 = vsel %vm2578, %v2577, %v2572
        %v2580 = vadd.s32 %v2477, 4294967176
        %v2581 = vlaneseq
        %v2582 = vshrl.u32 %v2581, 7
        %v2583 = vsub.s32 %v2580, %v2582
        %v2584 = vrot.slane %v2427, %v2583
        %vm2585 = vcmask 1048512
        %v2586 = vsel %vm2585, %v2584, %v2579
        %v2587 = vlaneseq
        %v2588 = vshrl.u32 %v2587, 7
        %v2589 = vsub.s32 %v2477, %v2588
        %v2590 = vrot.slane %v2428, %v2589
        %v2591 = vlaneseq
        %v2592 = vshrl.u32 %v2591, 7
        %v2593 = vsub.s32 %v2482, %v2592
        %v2594 = vrot.slane %v2429, %v2593
        %v2595 = vsel %vm2487, %v2594, %v2590
        %v2596 = vlaneseq
        %v2597 = vshrl.u32 %v2596, 7
        %v2598 = vsub.s32 %v2489, %v2597
        %v2599 = vrot.slane %v2430, %v2598
        %v2600 = vsel %vm2494, %v2599, %v2595
        %v2601 = vlaneseq
        %v2602 = vshrl.u32 %v2601, 7
        %v2603 = vsub.s32 %v2496, %v2602
        %v2604 = vrot.slane %v2431, %v2603
        %v2605 = vsel %vm2501, %v2604, %v2600
        %v2606 = vlaneseq
        %v2607 = vshrl.u32 %v2606, 7
        %v2608 = vsub.s32 %v2503, %v2607
        %v2609 = vrot.slane %v2432, %v2608
        %v2610 = vsel %vm2508, %v2609, %v2605
        %v2611 = vlaneseq
        %v2612 = vshrl.u32 %v2611, 7
        %v2613 = vsub.s32 %v2510, %v2612
        %v2614 = vrot.slane %v2433, %v2613
        %v2615 = vsel %vm2515, %v2614, %v2610
        %v2616 = vlaneseq
        %v2617 = vshrl.u32 %v2616, 7
        %v2618 = vsub.s32 %v2517, %v2617
        %v2619 = vrot.slane %v2434, %v2618
        %v2620 = vsel %vm2522, %v2619, %v2615
        %v2621 = vlaneseq
        %v2622 = vshrl.u32 %v2621, 7
        %v2623 = vsub.s32 %v2524, %v2622
        %v2624 = vrot.slane %v2435, %v2623
        %v2625 = vsel %vm2529, %v2624, %v2620
        %v2626 = vlaneseq
        %v2627 = vshrl.u32 %v2626, 7
        %v2628 = vsub.s32 %v2531, %v2627
        %v2629 = vrot.slane %v2436, %v2628
        %v2630 = vsel %vm2536, %v2629, %v2625
        %v2631 = vlaneseq
        %v2632 = vshrl.u32 %v2631, 7
        %v2633 = vsub.s32 %v2538, %v2632
        %v2634 = vrot.slane %v2437, %v2633
        %v2635 = vsel %vm2543, %v2634, %v2630
        %v2636 = vlaneseq
        %v2637 = vshrl.u32 %v2636, 7
        %v2638 = vsub.s32 %v2545, %v2637
        %v2639 = vrot.slane %v2438, %v2638
        %v2640 = vsel %vm2550, %v2639, %v2635
        %v2641 = vlaneseq
        %v2642 = vshrl.u32 %v2641, 7
        %v2643 = vsub.s32 %v2552, %v2642
        %v2644 = vrot.slane %v2439, %v2643
        %v2645 = vsel %vm2557, %v2644, %v2640
        %v2646 = vlaneseq
        %v2647 = vshrl.u32 %v2646, 7
        %v2648 = vsub.s32 %v2559, %v2647
        %v2649 = vrot.slane %v2440, %v2648
        %v2650 = vsel %vm2564, %v2649, %v2645
        %v2651 = vlaneseq
        %v2652 = vshrl.u32 %v2651, 7
        %v2653 = vsub.s32 %v2566, %v2652
        %v2654 = vrot.slane %v2441, %v2653
        %v2655 = vsel %vm2571, %v2654, %v2650
        %v2656 = vlaneseq
        %v2657 = vshrl.u32 %v2656, 7
        %v2658 = vsub.s32 %v2573, %v2657
        %v2659 = vrot.slane %v2442, %v2658
        %v2660 = vsel %vm2578, %v2659, %v2655
        %v2661 = vlaneseq
        %v2662 = vshrl.u32 %v2661, 7
        %v2663 = vsub.s32 %v2580, %v2662
        %v2664 = vrot.slane %v2443, %v2663
        %v2665 = vsel %vm2585, %v2664, %v2660
        %vm2666 = vcmask 1041409
        %v2667 = vsel %vm2666, %v2665, %v2586
        %2669 = vst [vmem:[%s588] sm:$0x3] %v2667
        %s2670 = sand.u32 %s338, 1
        %s2671 = scalar_lea.sflag [#allocation5], %s2670
        %s2672 = sand.u32 %s338, 1
        %s2673 = smul.addr %s2672, 2
        %s2674 = scalar_lea.vmem [#allocation14], %s2673
        // Predicated region
        $region97: #{tpu_custom_call.1} parent=71 // pred_check
          %p2675 = pneg %p348
        $region98: #{tpu_custom_call.1} parent=71 // pred_check_branch
          %2677 = sbr.rel (%p2675) target = $region100
        $region99: #{tpu_custom_call.1} parent=71 // pred_region
          %s2679 = ssub.s32 32, 32
          %2680 = vsyncadd %s2671, %s2679
          %s2681 = smul.addr %s37, 32
          %s2682 = scalar_lea.hbm %s13, %s2681
          %s2684 = sshll.u32 %s2674, 4
          %s2685 = int_to_ptr.vmem [resolvable:$true] %s2684
          %2687 = dma.vmem_to_hbm [thread:$0]  %s2685, 32, %s2682, %s2671
        $region100: #{tpu_custom_call.1} parent=71 // pred_fallthru
          _
      $region72: #{tpu_custom_call.1} parent=5 // pred_fallthru
        _
      %p2688 = scmp.le.s32.totalorder 2, %s32
      // Predicated region
      $region101: #{tpu_custom_call.1} parent=5 // pred_check
        %p2689 = pneg %p2688
      $region102: #{tpu_custom_call.1} parent=5 // pred_check_branch
        %2691 = sbr.rel (%p2689) target = $region104
      $region103: #{tpu_custom_call.1} parent=5 // pred_region
        %s2692 = ssub.s32 %s32, 2
        // Predicated region
        $region105: #{tpu_custom_call.1} parent=103 // pred_check
          %p2693 = pneg %p354
        $region106: #{tpu_custom_call.1} parent=103 // pred_check_branch
          %2695 = sbr.rel (%p2693) target = $region108
        $region107: #{tpu_custom_call.1} parent=103 // pred_region
          %s2696 = sand.u32 %s339, 1
          %s2697 = scalar_lea.sflag [#allocation5], %s2696
          %s2698 = sand.u32 %s339, 1
          %s2699 = smul.addr %s2698, 2
          %s2700 = scalar_lea.vmem [#allocation14], %s2699
          %2701 = dma.done %s2697, 32
        $region108: #{tpu_custom_call.1} parent=103 // pred_fallthru
          _
      $region104: #{tpu_custom_call.1} parent=5 // pred_fallthru
        _
    $region6: #{tpu_custom_call.1} parent=1 // loop_footer
      %s36 = sadd.s32 1, %s32
    $region7: #{tpu_custom_call.1} parent=1 // loop_footer_branch
      %31 = sbr.rel target = $region3
    $region8: #{tpu_custom_call.1} parent=1 // loop_exit
      _
    %2702 = vsyncpa [#allocation4], 1
    %s2703 = scalar_lea.sflag [#allocation4], 1
    %2704 = vsyncpa %s2703, 1
    %2705 = vsyncpa [#allocation7], 1
    %s2706 = scalar_lea.sflag [#allocation7], 1
    %2707 = vsyncpa %s2706, 1
    %2708 = vsyncpa [#allocation10], 1
    %2709 = vsyncpa [#allocation13], 1
    %2710 = vsyncpa [#allocation5], 1
    %s2711 = scalar_lea.sflag [#allocation5], 1
    %2712 = vsyncpa %s2711, 1

</llo_original>
